<compile_context>
chip_gen: v6e
topology: v6e:2x2x1
jax: 0.10.0
libtpu: 0.0.40
codegen_flags: <defaults>
</compile_context>

<pallas_src>
import functools

import jax
import jax.numpy as jnp
from jax.experimental import pallas as pl
from jax.experimental.pallas import tpu as pltpu

EMBEDDING_DIM = 384   # Settings().embedding_dim (synthetic, deterministic choice)
LN_EPS = 1e-5         # nn.LayerNorm default
HID_TEXT = 256        # text_projection hidden width
FEAT_TEXT = 128       # text_projection output width
HID_NUM = 64          # numerical_projection hidden width
FEAT_NUM = 32         # numerical_projection output width
NUM_RAW = 5           # numerical feature count


def _round_up(x, m):
    return ((x + m - 1) // m) * m


def _bias_layout(embed_dim):
    """Static, lane-aligned offsets inside the packed (1, total) bias/affine slab."""
    o_b1 = 0                                       # b1           (HID_TEXT lanes)
    o_b3 = _round_up(o_b1 + HID_TEXT, 128)         # b3           (HID_NUM lanes)
    o_bf = _round_up(o_b3 + HID_NUM, 128)          # fused bias   (embed_dim lanes)
    o_g = _round_up(o_bf + embed_dim, 128)         # LN gamma
    o_be = _round_up(o_g + embed_dim, 128)         # LN beta
    total = _round_up(o_be + embed_dim, 128)
    return o_b1, o_b3, o_bf, o_g, o_be, total


# ----------------------------------------------------------------------------- kernel
def _video_embed_kernel(text_ref, num_ref, w1_ref, w25_ref, w3_ref, w45_ref,
                        bias_ref, out_ref):
    f32 = jnp.float32
    cdt = w1_ref.dtype                      # MXU operand dtype (bf16); f32 accumulation
    embed_dim = out_ref.shape[-1]
    n_raw = num_ref.shape[-1]
    o_b1, o_b3, o_bf, o_g, o_be, _ = _bias_layout(embed_dim)

    # Static, lane-aligned slices of the packed bias/affine slab.
    b1 = bias_ref[:, o_b1:o_b1 + HID_TEXT]           # (1, 256)
    b3 = bias_ref[:, o_b3:o_b3 + HID_NUM]            # (1, 64)
    b_fused = bias_ref[:, o_bf:o_bf + embed_dim]     # (1, E) = b2@W5t + b4@W5n + b5
    gamma = bias_ref[:, o_g:o_g + embed_dim]         # (1, E)
    beta = bias_ref[:, o_be:o_be + embed_dim]        # (1, E)

    # ---- text branch: relu(text @ W1 + b1) @ (W2 @ W5[:128])   (MXU, bf16 / f32 acc)
    h1 = jnp.dot(text_ref[...].astype(cdt), w1_ref[...],
                 preferred_element_type=f32) + b1
    h1 = jnp.maximum(h1, 0.0)
    z = jnp.dot(h1.astype(cdt), w25_ref[...], preferred_element_type=f32)   # (tb, E)

    # ---- numerical branch first layer Linear(5, 64): five rank-1 VPU updates,
    #      exact f32 (no HBM padding, no wasted MXU pass at K=5).
    n = num_ref[...].astype(f32)                     # (tb, 5)
    w3 = w3_ref[...]                                 # (5, 64) f32
    acc = n[:, 0:1] * w3[0:1, :]
    for k in range(1, n_raw):                        # static unroll, n_raw = 5
        acc = acc + n[:, k:k + 1] * w3[k:k + 1, :]
    h2 = jnp.maximum(acc + b3, 0.0)                  # (tb, 64)

    # ---- numerical second layer folded into the final projection: h2 @ (W4 @ W5[128:160])
    z = z + jnp.dot(h2.astype(cdt), w45_ref[...], preferred_element_type=f32) + b_fused

    # ---- LayerNorm(E): XLU reductions + EUP rsqrt, all f32.
    mean = jnp.mean(z, axis=-1, keepdims=True)
    var = jnp.mean(jnp.square(z - mean), axis=-1, keepdims=True)
    zn = (z - mean) * jax.lax.rsqrt(var + LN_EPS)
    out_ref[...] = (zn * gamma + beta).astype(out_ref.dtype)


# ----------------------------------------------------------------------------- wrapper
def _pick_tile_b(batch, tile_b_max=1024, min_tiles=2):
    """Largest multiple-of-8 batch tile <= tile_b_max giving >= min_tiles grid
    steps (keeps both v7x TensorCores busy).  Prefers exact divisors of `batch`
    so every block is full; otherwise the ragged last block is clipped by Pallas."""
    cap = max(8, min(tile_b_max, _round_up(-(-batch // min_tiles), 8)))
    for t in range(cap, 0, -8):
        if batch % t == 0:
            return t
    return cap


@functools.partial(jax.jit, static_argnames=("tile_b", "out_dtype"))
def _video_embedding_forward(text_embedding, numerical_features, packed_params,
                             *, tile_b, out_dtype):
    batch, embed_dim = text_embedding.shape
    n_raw = numerical_features.shape[1]
    W1, W25, W3, W45, bias_pack = packed_params
    num_tiles = pl.cdiv(batch, tile_b)

    # Advisory cost estimate, consistent with the real HBM traffic / dtypes.
    flops = 2 * batch * (embed_dim * HID_TEXT + HID_TEXT * embed_dim
                         + n_raw * HID_NUM + HID_NUM * embed_dim)
    weight_bytes = sum(int(a.size) * a.dtype.itemsize for a in packed_params)
    bytes_accessed = (batch * embed_dim * text_embedding.dtype.itemsize
                      + batch * n_raw * numerical_features.dtype.itemsize
                      + batch * embed_dim * jnp.dtype(out_dtype).itemsize
                      + weight_bytes)

    return pl.pallas_call(
        _video_embed_kernel,
        out_shape=jax.ShapeDtypeStruct((batch, embed_dim), out_dtype),
        grid_spec=pltpu.PrefetchScalarGridSpec(
            num_scalar_prefetch=0,
            grid=(num_tiles,),
            in_specs=[
                pl.BlockSpec((tile_b, embed_dim), lambda i: (i, 0)),   # text tile
                pl.BlockSpec((tile_b, n_raw), lambda i: (i, 0)),       # num tile (native width 5)
                pl.BlockSpec(W1.shape, lambda i: (0, 0)),              # grid-invariant weights
                pl.BlockSpec(W25.shape, lambda i: (0, 0)),
                pl.BlockSpec(W3.shape, lambda i: (0, 0)),
                pl.BlockSpec(W45.shape, lambda i: (0, 0)),
                pl.BlockSpec(bias_pack.shape, lambda i: (0, 0)),
            ],
            out_specs=pl.BlockSpec((tile_b, embed_dim), lambda i: (i, 0)),
        ),
        compiler_params=pltpu.CompilerParams(
            # Batch axis is embarrassingly parallel -> shards across v7x's 2 TCs.
            # VMEM use at tile_b=1024 is ~15 MiB, under the 32 MiB scoped default
            # on every generation, so no vmem_limit_bytes override is needed.
            dimension_semantics=("parallel",)),
        cost_estimate=pl.CostEstimate(flops=flops, transcendentals=batch,
                                      bytes_accessed=bytes_accessed),
    )(text_embedding, numerical_features, W1, W25, W3, W45, bias_pack)


def video_embedding_forward(text_embedding, numerical_features, packed_params,
                            *, tile_b=None, out_dtype=None):
    """Fused forward pass.  `text_embedding` may be f32 or bf16 (bf16 halves the
    dominant HBM stream); `out_dtype` defaults to the text dtype."""
    if out_dtype is None:
        out_dtype = text_embedding.dtype
    if tile_b is None:
        tile_b = _pick_tile_b(text_embedding.shape[0])
    return _video_embedding_forward(text_embedding, numerical_features,
                                    packed_params, tile_b=int(tile_b),
                                    out_dtype=jnp.dtype(out_dtype))


# ----------------------------------------------------------------------------- params
def init_params(key, embedding_dim=EMBEDDING_DIM):
    """Raw f32 parameters, weights stored as (in, out) == PyTorch W.T."""
    ks = jax.random.split(key, 6)

    def lin(k, fan_in, fan_out):
        bound = 1.0 / jnp.sqrt(jnp.float32(fan_in))
        kw, kb = jax.random.split(k)
        w = jax.random.uniform(kw, (fan_in, fan_out), jnp.float32, -bound, bound)
        b = jax.random.uniform(kb, (fan_out,), jnp.float32, -bound, bound)
        return w, b

    w1, b1 = lin(ks[0], embedding_dim, HID_TEXT)       # text_projection.0
    w2, b2 = lin(ks[1], HID_TEXT, FEAT_TEXT)           # text_projection.3
    w3, b3 = lin(ks[2], NUM_RAW, HID_NUM)              # numerical_projection.0
    w4, b4 = lin(ks[3], HID_NUM, FEAT_NUM)             # numerical_projection.3
    w5, b5 = lin(ks[4], FEAT_TEXT + FEAT_NUM, embedding_dim)   # final_projection.0
    # PyTorch inits LayerNorm to gamma=1, beta=0; perturb them here so the test
    # actually exercises the affine path (forward semantics are identical for
    # arbitrary trained parameters).
    kg, kb = jax.random.split(ks[5])
    gamma = 1.0 + 0.1 * jax.random.normal(kg, (embedding_dim,), jnp.float32)
    beta = 0.1 * jax.random.normal(kb, (embedding_dim,), jnp.float32)
    return (w1, b1, w2, b2, w3, b3, w4, b4, w5, b5, gamma, beta)


def pack_params(raw_params, mxu_dtype=jnp.bfloat16):
    """Fold + cast raw params into the layout the kernel consumes.

    concat([t2, n2]) @ W5 == t2 @ W5[:128] + n2 @ W5[128:160], with
    t2 = h1 @ W2 + b2 and n2 = h2 @ W4 + b4, so
      z = h1 @ (W2 @ W5[:128]) + h2 @ (W4 @ W5[128:160])
          + (b2 @ W5[:128] + b4 @ W5[128:160] + b5).
    Folding is done in f32, then the MXU weights are cast to bf16 once."""
    (w1, b1, w2, b2, w3, b3, w4, b4, w5, b5, gamma, beta) = raw_params
    f32 = jnp.float32
    embed_dim = w5.shape[1]

    w5_t = w5[:FEAT_TEXT].astype(f32)                       # (128, E)
    w5_n = w5[FEAT_TEXT:FEAT_TEXT + FEAT_NUM].astype(f32)   # (32, E)
    W25 = (w2.astype(f32) @ w5_t).astype(mxu_dtype)         # (256, E)
    W45 = (w4.astype(f32) @ w5_n).astype(mxu_dtype)         # (64, E)
    b_fused = b2.astype(f32) @ w5_t + b4.astype(f32) @ w5_n + b5.astype(f32)

    W1 = w1.astype(mxu_dtype)                               # (E, 256) MXU
    W3 = w3.astype(f32)                                     # (5, 64)  exact f32 VPU path

    o_b1, o_b3, o_bf, o_g, o_be, total = _bias_layout(embed_dim)
    bias_pack = jnp.zeros((1, total), f32)
    bias_pack = bias_pack.at[0, o_b1:o_b1 + HID_TEXT].set(b1)
    bias_pack = bias_pack.at[0, o_b3:o_b3 + HID_NUM].set(b3)
    bias_pack = bias_pack.at[0, o_bf:o_bf + embed_dim].set(b_fused)
    bias_pack = bias_pack.at[0, o_g:o_g + embed_dim].set(gamma)
    bias_pack = bias_pack.at[0, o_be:o_be + embed_dim].set(beta)
    return (W1, W25, W3, W45, bias_pack)


# ----------------------------------------------------------------------------- references
def reference_forward_f32(text_embedding, numerical_features, raw_params):
    """Pure f32 path == PyTorch module semantics (eval mode)."""
    (w1, b1, w2, b2, w3, b3, w4, b4, w5, b5, gamma, beta) = raw_params
    hi = jax.lax.Precision.HIGHEST
    t = jnp.maximum(jnp.dot(text_embedding, w1, precision=hi) + b1, 0.0)
    t = jnp.dot(t, w2, precision=hi) + b2
    n = jnp.maximum(jnp.dot(numerical_features, w3, precision=hi) + b3, 0.0)
    n = jnp.dot(n, w4, precision=hi) + b4
    z = jnp.dot(jnp.concatenate([t, n], axis=-1), w5, precision=hi) + b5
    mu = jnp.mean(z, axis=-1, keepdims=True)
    var = jnp.mean((z - mu) ** 2, axis=-1, keepdims=True)
    return (z - mu) / jnp.sqrt(var + LN_EPS) * gamma + beta


def reference_forward_matched(text_embedding, numerical_features, packed_params,
                              out_dtype=jnp.float32):
    """Same math as the kernel (folded weights, bf16 MXU operands, f32 accumulation)."""
    W1, W25, W3, W45, bias_pack = packed_params
    f32, cdt = jnp.float32, W1.dtype
    embed_dim = W25.shape[1]
    o_b1, o_b3, o_bf, o_g, o_be, _ = _bias_layout(embed_dim)
    b1 = bias_pack[:, o_b1:o_b1 + HID_TEXT]
    b3 = bias_pack[:, o_b3:o_b3 + HID_NUM]
    b_fused = bias_pack[:, o_bf:o_bf + embed_dim]
    gamma = bias_pack[:, o_g:o_g + embed_dim]
    beta = bias_pack[:, o_be:o_be + embed_dim]

    h1 = jnp.maximum(jnp.dot(text_embedding.astype(cdt), W1,
                             preferred_element_type=f32) + b1, 0.0)
    z = jnp.dot(h1.astype(cdt), W25, preferred_element_type=f32)
    h2 = jnp.maximum(jnp.dot(numerical_features.astype(f32), W3,
                             precision=jax.lax.Precision.HIGHEST) + b3, 0.0)
    z = z + jnp.dot(h2.astype(cdt), W45, preferred_element_type=f32) + b_fused
    mu = jnp.mean(z, axis=-1, keepdims=True)
    var = jnp.mean(jnp.square(z - mu), axis=-1, keepdims=True)
    out = (z - mu) * jax.lax.rsqrt(var + LN_EPS) * gamma + beta
    return out.astype(out_dtype)


# ----------------------------------------------------------------------------- main
if __name__ == "__main__":
    key = jax.random.PRNGKey(0)
    k_p, k_t1, k_n1, k_t2, k_n2 = jax.random.split(key, 5)

    raw_params = init_params(k_p)
    packed_params = pack_params(raw_params)
    E = EMBEDDING_DIM

    # Case 1: small batch (tile_b=24 divides it -> 2 full grid steps), f32 in / f32 out.
    B1 = 48
    text1 = jax.random.normal(k_t1, (B1, E), jnp.float32)
    num1 = jax.random.normal(k_n1, (B1, NUM_RAW), jnp.float32)
    out1 = jax.block_until_ready(
        video_embedding_forward(text1, num1, packed_params, out_dtype=jnp.float32))
    assert out1.shape == (B1, E) and out1.dtype == jnp.float32

    ref1 = reference_forward_matched(text1, num1, packed_params, out_dtype=jnp.float32)
    assert jnp.allclose(out1, ref1, atol=1e-2, rtol=0), "kernel vs matched-math reference mismatch"

    ref1_f32 = reference_forward_f32(text1, num1, raw_params)
    err = jnp.abs(out1 - ref1_f32)
    assert float(jnp.sqrt(jnp.mean(err * err))) < 3e-2, "bf16/folded RMS drift too large"
    assert float(jnp.max(err)) < 2e-1, "bf16/folded max drift too large"

    # Case 2: ragged batch (19 with tile_b=16 -> clipped last block), bf16 in / bf16 out.
    B2 = 19
    text2 = jax.random.normal(k_t2, (B2, E), jnp.float32).astype(jnp.bfloat16)
    num2 = jax.random.normal(k_n2, (B2, NUM_RAW), jnp.float32)
    out2 = jax.block_until_ready(video_embedding_forward(text2, num2, packed_params))
    assert out2.shape == (B2, E) and out2.dtype == jnp.bfloat16
    assert bool(jnp.all(jnp.isfinite(out2.astype(jnp.float32))))

    ref2 = reference_forward_matched(text2.astype(jnp.float32), num2, packed_params,
                                     out_dtype=jnp.bfloat16)
    assert jnp.allclose(out2.astype(jnp.float32), ref2.astype(jnp.float32),
                        atol=5e-2, rtol=0), "mismatch on ragged-batch / bf16-I/O path"

    print("KERNEL_OK")
</pallas_src>

<mosaic_0001>
module attributes {stable_mosaic.version = 11 : i64} {
  func.func @_video_embed_kernel(%arg0: i32, %arg1: memref<24x384xf32, #tpu.memory_space<vmem>>, %arg2: memref<24x5xf32, #tpu.memory_space<vmem>>, %arg3: memref<384x256xbf16, #tpu.memory_space<vmem>>, %arg4: memref<256x384xbf16, #tpu.memory_space<vmem>>, %arg5: memref<5x64xf32, #tpu.memory_space<vmem>>, %arg6: memref<64x384xbf16, #tpu.memory_space<vmem>>, %arg7: memref<1x1536xf32, #tpu.memory_space<vmem>>, %arg8: memref<24x384xf32, #tpu.memory_space<vmem>>) attributes {dimension_semantics = [#tpu.dimension_semantics<parallel>], iteration_bounds = array<i64: 2>, scalar_prefetch = 0 : i64, scratch_operands = 0 : i64, tpu.core_type = #tpu.core_type<tc>, window_params = [{transform_indices = @transform_0, window_bounds = array<i64: 24, 384>}, {transform_indices = @transform_1, window_bounds = array<i64: 24, 5>}, {pipeline_mode = #tpu.pipeline_mode<synchronous>, transform_indices = @transform_2, window_bounds = array<i64: 384, 256>}, {pipeline_mode = #tpu.pipeline_mode<synchronous>, transform_indices = @transform_3, window_bounds = array<i64: 256, 384>}, {pipeline_mode = #tpu.pipeline_mode<synchronous>, transform_indices = @transform_4, window_bounds = array<i64: 5, 64>}, {pipeline_mode = #tpu.pipeline_mode<synchronous>, transform_indices = @transform_5, window_bounds = array<i64: 64, 384>}, {pipeline_mode = #tpu.pipeline_mode<synchronous>, transform_indices = @transform_6, window_bounds = array<i64: 1, 1536>}, {transform_indices = @transform_7, window_bounds = array<i64: 24, 384>}]} {
    %c0 = arith.constant 0 : index
    %c0_0 = arith.constant 0 : index
    %0 = vector.load %arg7[%c0, %c0_0] : memref<1x1536xf32, #tpu.memory_space<vmem>>, vector<1x256xf32>
    %c0_1 = arith.constant 0 : index
    %c256 = arith.constant 256 : index
    %1 = vector.load %arg7[%c0_1, %c256] : memref<1x1536xf32, #tpu.memory_space<vmem>>, vector<1x64xf32>
    %c0_2 = arith.constant 0 : index
    %c384 = arith.constant 384 : index
    %2 = vector.load %arg7[%c0_2, %c384] : memref<1x1536xf32, #tpu.memory_space<vmem>>, vector<1x384xf32>
    %c0_3 = arith.constant 0 : index
    %c768 = arith.constant 768 : index
    %3 = vector.load %arg7[%c0_3, %c768] : memref<1x1536xf32, #tpu.memory_space<vmem>>, vector<1x384xf32>
    %c0_4 = arith.constant 0 : index
    %c1152 = arith.constant 1152 : index
    %4 = vector.load %arg7[%c0_4, %c1152] : memref<1x1536xf32, #tpu.memory_space<vmem>>, vector<1x384xf32>
    %c0_5 = arith.constant 0 : index
    %c0_6 = arith.constant 0 : index
    %5 = vector.load %arg1[%c0_5, %c0_6] : memref<24x384xf32, #tpu.memory_space<vmem>>, vector<24x384xf32>
    %6 = arith.truncf %5 : vector<24x384xf32> to vector<24x384xbf16>
    %c0_7 = arith.constant 0 : index
    %c0_8 = arith.constant 0 : index
    %7 = vector.load %arg3[%c0_7, %c0_8] : memref<384x256xbf16, #tpu.memory_space<vmem>>, vector<384x256xbf16>
    %cst = arith.constant dense<0.000000e+00> : vector<24x256xf32>
    %8 = tpu.matmul %6, %7, %cst {dimension_numbers = #tpu.dot_dimension_numbers<[1], [0], [0], [1], [0, 0, 1, 1], [], []>} : vector<24x384xbf16>, vector<384x256xbf16>, vector<24x256xf32> -> vector<24x256xf32>
    %9 = vector.broadcast %0 : vector<1x256xf32> to vector<24x256xf32>
    %10 = arith.addf %8, %9 : vector<24x256xf32>
    %cst_9 = arith.constant 0.000000e+00 : f32
    %11 = vector.broadcast %cst_9 : f32 to vector<24x256xf32>
    %12 = arith.maximumf %10, %11 : vector<24x256xf32>
    %13 = arith.truncf %12 : vector<24x256xf32> to vector<24x256xbf16>
    %c0_10 = arith.constant 0 : index
    %c0_11 = arith.constant 0 : index
    %14 = vector.load %arg4[%c0_10, %c0_11] : memref<256x384xbf16, #tpu.memory_space<vmem>>, vector<256x384xbf16>
    %cst_12 = arith.constant dense<0.000000e+00> : vector<24x384xf32>
    %15 = tpu.matmul %13, %14, %cst_12 {dimension_numbers = #tpu.dot_dimension_numbers<[1], [0], [0], [1], [0, 0, 1, 1], [], []>} : vector<24x256xbf16>, vector<256x384xbf16>, vector<24x384xf32> -> vector<24x384xf32>
    %c0_13 = arith.constant 0 : index
    %c0_14 = arith.constant 0 : index
    %16 = vector.load %arg2[%c0_13, %c0_14] : memref<24x5xf32, #tpu.memory_space<vmem>>, vector<24x5xf32>
    %c0_15 = arith.constant 0 : index
    %c0_16 = arith.constant 0 : index
    %17 = vector.load %arg5[%c0_15, %c0_16] : memref<5x64xf32, #tpu.memory_space<vmem>>, vector<5x64xf32>
    %18 = vector.extract_strided_slice %16 {offsets = [0, 0], sizes = [24, 1], strides = [1, 1]} : vector<24x5xf32> to vector<24x1xf32>
    %19 = vector.extract_strided_slice %17 {offsets = [0, 0], sizes = [1, 64], strides = [1, 1]} : vector<5x64xf32> to vector<1x64xf32>
    %20 = vector.broadcast %18 : vector<24x1xf32> to vector<24x64xf32>
    %21 = vector.broadcast %19 : vector<1x64xf32> to vector<24x64xf32>
    %22 = arith.mulf %20, %21 : vector<24x64xf32>
    %23 = vector.extract_strided_slice %16 {offsets = [0, 1], sizes = [24, 1], strides = [1, 1]} : vector<24x5xf32> to vector<24x1xf32>
    %24 = vector.extract_strided_slice %17 {offsets = [1, 0], sizes = [1, 64], strides = [1, 1]} : vector<5x64xf32> to vector<1x64xf32>
    %25 = vector.broadcast %23 : vector<24x1xf32> to vector<24x64xf32>
    %26 = vector.broadcast %24 : vector<1x64xf32> to vector<24x64xf32>
    %27 = arith.mulf %25, %26 : vector<24x64xf32>
    %28 = arith.addf %22, %27 : vector<24x64xf32>
    %29 = vector.extract_strided_slice %16 {offsets = [0, 2], sizes = [24, 1], strides = [1, 1]} : vector<24x5xf32> to vector<24x1xf32>
    %30 = vector.extract_strided_slice %17 {offsets = [2, 0], sizes = [1, 64], strides = [1, 1]} : vector<5x64xf32> to vector<1x64xf32>
    %31 = vector.broadcast %29 : vector<24x1xf32> to vector<24x64xf32>
    %32 = vector.broadcast %30 : vector<1x64xf32> to vector<24x64xf32>
    %33 = arith.mulf %31, %32 : vector<24x64xf32>
    %34 = arith.addf %28, %33 : vector<24x64xf32>
    %35 = vector.extract_strided_slice %16 {offsets = [0, 3], sizes = [24, 1], strides = [1, 1]} : vector<24x5xf32> to vector<24x1xf32>
    %36 = vector.extract_strided_slice %17 {offsets = [3, 0], sizes = [1, 64], strides = [1, 1]} : vector<5x64xf32> to vector<1x64xf32>
    %37 = vector.broadcast %35 : vector<24x1xf32> to vector<24x64xf32>
    %38 = vector.broadcast %36 : vector<1x64xf32> to vector<24x64xf32>
    %39 = arith.mulf %37, %38 : vector<24x64xf32>
    %40 = arith.addf %34, %39 : vector<24x64xf32>
    %41 = vector.extract_strided_slice %16 {offsets = [0, 4], sizes = [24, 1], strides = [1, 1]} : vector<24x5xf32> to vector<24x1xf32>
    %42 = vector.extract_strided_slice %17 {offsets = [4, 0], sizes = [1, 64], strides = [1, 1]} : vector<5x64xf32> to vector<1x64xf32>
    %43 = vector.broadcast %41 : vector<24x1xf32> to vector<24x64xf32>
    %44 = vector.broadcast %42 : vector<1x64xf32> to vector<24x64xf32>
    %45 = arith.mulf %43, %44 : vector<24x64xf32>
    %46 = arith.addf %40, %45 : vector<24x64xf32>
    %47 = vector.broadcast %1 : vector<1x64xf32> to vector<24x64xf32>
    %48 = arith.addf %46, %47 : vector<24x64xf32>
    %cst_17 = arith.constant 0.000000e+00 : f32
    %49 = vector.broadcast %cst_17 : f32 to vector<24x64xf32>
    %50 = arith.maximumf %48, %49 : vector<24x64xf32>
    %51 = arith.truncf %50 : vector<24x64xf32> to vector<24x64xbf16>
    %c0_18 = arith.constant 0 : index
    %c0_19 = arith.constant 0 : index
    %52 = vector.load %arg6[%c0_18, %c0_19] : memref<64x384xbf16, #tpu.memory_space<vmem>>, vector<64x384xbf16>
    %cst_20 = arith.constant dense<0.000000e+00> : vector<24x384xf32>
    %53 = tpu.matmul %51, %52, %cst_20 {dimension_numbers = #tpu.dot_dimension_numbers<[1], [0], [0], [1], [0, 0, 1, 1], [], []>} : vector<24x64xbf16>, vector<64x384xbf16>, vector<24x384xf32> -> vector<24x384xf32>
    %54 = arith.addf %15, %53 : vector<24x384xf32>
    %55 = vector.broadcast %2 : vector<1x384xf32> to vector<24x384xf32>
    %56 = arith.addf %54, %55 : vector<24x384xf32>
    %cst_21 = arith.constant dense<0.000000e+00> : vector<24xf32>
    %57 = vector.multi_reduction <add>, %56, %cst_21 [1] : vector<24x384xf32> to vector<24xf32>
    %58 = vector.shape_cast %57 : vector<24xf32> to vector<24x1xf32>
    %cst_22 = arith.constant 3.840000e+02 : f32
    %59 = vector.broadcast %cst_22 : f32 to vector<24x1xf32>
    %60 = arith.divf %58, %59 : vector<24x1xf32>
    %61 = vector.broadcast %60 : vector<24x1xf32> to vector<24x384xf32>
    %62 = arith.subf %56, %61 : vector<24x384xf32>
    %63 = arith.mulf %62, %62 : vector<24x384xf32>
    %cst_23 = arith.constant dense<0.000000e+00> : vector<24xf32>
    %64 = vector.multi_reduction <add>, %63, %cst_23 [1] : vector<24x384xf32> to vector<24xf32>
    %65 = vector.shape_cast %64 : vector<24xf32> to vector<24x1xf32>
    %cst_24 = arith.constant 3.840000e+02 : f32
    %66 = vector.broadcast %cst_24 : f32 to vector<24x1xf32>
    %67 = arith.divf %65, %66 : vector<24x1xf32>
    %68 = vector.broadcast %60 : vector<24x1xf32> to vector<24x384xf32>
    %69 = arith.subf %56, %68 : vector<24x384xf32>
    %cst_25 = arith.constant 9.99999974E-6 : f32
    %70 = vector.broadcast %cst_25 : f32 to vector<24x1xf32>
    %71 = arith.addf %67, %70 : vector<24x1xf32>
    %72 = math.rsqrt %71 : vector<24x1xf32>
    %73 = vector.broadcast %72 : vector<24x1xf32> to vector<24x384xf32>
    %74 = arith.mulf %69, %73 : vector<24x384xf32>
    %75 = vector.broadcast %3 : vector<1x384xf32> to vector<24x384xf32>
    %76 = arith.mulf %74, %75 : vector<24x384xf32>
    %77 = vector.broadcast %4 : vector<1x384xf32> to vector<24x384xf32>
    %78 = arith.addf %76, %77 : vector<24x384xf32>
    %c0_26 = arith.constant 0 : index
    %c0_27 = arith.constant 0 : index
    %79 = vector.load %arg8[%c0_26, %c0_27] : memref<24x384xf32, #tpu.memory_space<vmem>>, vector<24x384xf32>
    tpu.vector_store %arg8[%c0_26, %c0_27], %78 {strides = array<i32>} : memref<24x384xf32, #tpu.memory_space<vmem>>, vector<24x384xf32>,
    return
  }
  func.func @transform_0(%arg0: i32) -> (i32, i32) {
    %c0_i32 = arith.constant 0 : i32
    %c0_i32_0 = arith.constant 0 : i32
    return %arg0, %c0_i32 : i32, i32
  }
  func.func @transform_1(%arg0: i32) -> (i32, i32) {
    %c0_i32 = arith.constant 0 : i32
    %c0_i32_0 = arith.constant 0 : i32
    return %arg0, %c0_i32 : i32, i32
  }
  func.func @transform_2(%arg0: i32) -> (i32, i32) {
    %c0_i32 = arith.constant 0 : i32
    %c0_i32_0 = arith.constant 0 : i32
    %c0_i32_1 = arith.constant 0 : i32
    return %c0_i32, %c0_i32_0 : i32, i32
  }
  func.func @transform_3(%arg0: i32) -> (i32, i32) {
    %c0_i32 = arith.constant 0 : i32
    %c0_i32_0 = arith.constant 0 : i32
    %c0_i32_1 = arith.constant 0 : i32
    return %c0_i32, %c0_i32_0 : i32, i32
  }
  func.func @transform_4(%arg0: i32) -> (i32, i32) {
    %c0_i32 = arith.constant 0 : i32
    %c0_i32_0 = arith.constant 0 : i32
    %c0_i32_1 = arith.constant 0 : i32
    return %c0_i32, %c0_i32_0 : i32, i32
  }
  func.func @transform_5(%arg0: i32) -> (i32, i32) {
    %c0_i32 = arith.constant 0 : i32
    %c0_i32_0 = arith.constant 0 : i32
    %c0_i32_1 = arith.constant 0 : i32
    return %c0_i32, %c0_i32_0 : i32, i32
  }
  func.func @transform_6(%arg0: i32) -> (i32, i32) {
    %c0_i32 = arith.constant 0 : i32
    %c0_i32_0 = arith.constant 0 : i32
    %c0_i32_1 = arith.constant 0 : i32
    return %c0_i32, %c0_i32_0 : i32, i32
  }
  func.func @transform_7(%arg0: i32) -> (i32, i32) {
    %c0_i32 = arith.constant 0 : i32
    %c0_i32_0 = arith.constant 0 : i32
    return %arg0, %c0_i32 : i32, i32
  }
}

</mosaic_0001>

<llo_original>
// kernel: _video_embedding_forward.1
$region0: #{_video_embedding_forward.1}
  #allocation0 [shape = 'u32[]', space=smem, size = 0x4, offset = 0x4, fixed_abs, tag = 'smem constant byte address 0x4 - core index']
  #allocation1 [shape = 'u32[144,128]{1,0:T(1,128)}', space=vmem, size = 0x12000, scoped, tag = 'internal scratch']
  %s0 = inlined_call_operand.hbm [shape: f32[48,384], index: 0, kind: input, shape index: {}]
  %s1 = inlined_call_operand.vmem [shape: f32[48,5], index: 1, kind: input, shape index: {}]
  %s2 = inlined_call_operand.hbm [shape: bf16[384,256], index: 2, kind: input, shape index: {}]
  %s3 = inlined_call_operand.hbm [shape: bf16[256,384], index: 3, kind: input, shape index: {}]
  %s4 = inlined_call_operand.vmem [shape: f32[5,64], index: 4, kind: input, shape index: {}]
  %s5 = inlined_call_operand.hbm [shape: bf16[64,384], index: 5, kind: input, shape index: {}]
  %s6 = inlined_call_operand.vmem [shape: f32[1,1536], index: 6, kind: input, shape index: {}]
  %s7 = inlined_call_operand.hbm [shape: f32[48,384], index: 7, kind: output, shape index: {}]
  %s8 = sld [smem:[#allocation0]]
  $region77: #{_video_embedding_forward.1} parent=0
    _
  %s10 = ssub.s32 1, %s8
  %s11 = scalar_select 0, %s10, %s8
  $region1: #{_video_embedding_forward.1} parent=0
    #allocation2 [shape = 'u8[73728]{0}', space=vmem, size = 0x12000, scoped, tag = 'input window, operand 0']
    #allocation3 [shape = 's32[2]{0}', space=sflag, size = 0x8, scoped, tag = 'scoped memory for _video_embedding_forward.1']
    #allocation4 [shape = 's32[2]{0}', space=sflag, size = 0x8, scoped, tag = 'scoped memory for _video_embedding_forward.1']
    #allocation5 [shape = 'u8[196608]{0}', space=vmem, size = 0x30000, scoped, tag = 'input window, operand 2, single buffered']
    #allocation6 [shape = 's32[1]{0}', space=sflag, size = 0x4, scoped, tag = 'scoped memory for _video_embedding_forward.1']
    #allocation7 [shape = 'u8[196608]{0}', space=vmem, size = 0x30000, scoped, tag = 'input window, operand 3, single buffered']
    #allocation8 [shape = 'u8[49152]{0}', space=vmem, size = 0xc000, scoped, tag = 'input window, operand 5, single buffered']
    #allocation9 [shape = 's32[1]{0}', space=sflag, size = 0x4, scoped, tag = 'scoped memory for _video_embedding_forward.1']
    #allocation10 [shape = 'u8[73728]{0}', space=vmem, size = 0x12000, scoped, tag = 'output window, operand 0']
    %12 = vsyncpa [#allocation3], 0
    %s13 = scalar_lea.sflag [#allocation3], 1
    %14 = vsyncpa %s13, 0
    %15 = vsyncpa [#allocation6], 0
    %16 = vsyncpa [#allocation9], 0
    %17 = vsyncpa [#allocation4], 0
    %s18 = scalar_lea.sflag [#allocation4], 1
    %19 = vsyncpa %s18, 0
    loop: start=0, step=1, limit=4
    $region2: #{_video_embedding_forward.1} parent=1 // loop_pre_header
      _
    $region3: #{_video_embedding_forward.1} parent=1 // loop_header
      %s21 = sphi 0, %s25
      %p22 = scmp.ge.s32.totalorder %s21, 4
      %s31 = sphi 0, %s33
      %s34 = sphi 0, %s31
      %s35 = sphi 0, %s34
      %s51 = sphi 0, %s35
      %s57 = sphi 0, %s59
      %s60 = sphi 0, %s57
      %s61 = sphi 0, %s60
      %s77 = sphi 0, %s61
      %s81 = sphi 0, %s81
      %s83 = sphi 0, %s81
      %s84 = sphi 0, %s83
      %s98 = sphi 0, %s84
      %s102 = sphi 0, %s102
      %s104 = sphi 0, %s102
      %s105 = sphi 0, %s104
      %s119 = sphi 0, %s105
      %s123 = sphi 0, %s123
      %s125 = sphi 0, %s123
      %s126 = sphi 0, %s125
      %s140 = sphi 0, %s126
      %s144 = sphi 0, %s144
      %s146 = sphi 0, %s144
      %s147 = sphi 0, %s146
      %s161 = sphi 0, %s147
      %s165 = sphi 0, %s165
      %s167 = sphi 0, %s165
      %s168 = sphi 0, %s167
      %s182 = sphi 0, %s168
      %s188 = sphi 0, %s190
      %s191 = sphi 0, %s188
      %s192 = sphi 0, %s191
      %s208 = sphi 0, %s192
    $region4: #{_video_embedding_forward.1} parent=1 // loop_header_branch
      %24 = sbr.rel (%p22) target = $region8
    $region5: #{_video_embedding_forward.1} parent=1 // loop_body
      %s26 = ssub.s32 %s21, 1
      %s27 = ssub.s32 %s21, 2
      %s28 = sadd.s32 %s21, 1
      %s29 = ssub.s32 %s21, %s28
      %p30 = scmp.eq.s32.totalorder %s29, 0
      %s32 = sadd.s32 %s31, 1
      %s33 = scalar_select %p30, %s31, %s32
      %p36 = pneg %p30
      %p37 = scmp.eq.s32.totalorder %s21, 1
      %p38 = por %p36, %p37
      %p39 = scmp.ne.s32.totalorder %s31, %s34
      %p40 = scmp.eq.s32.totalorder %s21, 0
      %p41 = por %p39, %p40
      %p42 = scmp.ne.s32.totalorder %s31, %s34
      %p43 = scmp.eq.s32.totalorder %s26, 1
      %p44 = por %p42, %p43
      %p45 = scmp.ne.s32.totalorder %s34, %s35
      %p46 = scmp.eq.s32.totalorder %s26, 0
      %p47 = por %p45, %p46
      %p48 = scmp.ne.s32.totalorder %s34, %s35
      %p49 = scmp.eq.s32.totalorder %s27, 1
      %p50 = por %p48, %p49
      %p52 = scmp.ne.s32.totalorder %s35, %s51
      %p53 = scmp.eq.s32.totalorder %s27, 0
      %p54 = por %p52, %p53
      %s55 = ssub.s32 %s21, %s28
      %p56 = scmp.eq.s32.totalorder %s55, 0
      %s58 = sadd.s32 %s57, 1
      %s59 = scalar_select %p56, %s57, %s58
      %p62 = pneg %p56
      %p63 = scmp.eq.s32.totalorder %s21, 1
      %p64 = por %p62, %p63
      %p65 = scmp.ne.s32.totalorder %s57, %s60
      %p66 = scmp.eq.s32.totalorder %s21, 0
      %p67 = por %p65, %p66
      %p68 = scmp.ne.s32.totalorder %s57, %s60
      %p69 = scmp.eq.s32.totalorder %s26, 1
      %p70 = por %p68, %p69
      %p71 = scmp.ne.s32.totalorder %s60, %s61
      %p72 = scmp.eq.s32.totalorder %s26, 0
      %p73 = por %p71, %p72
      %p74 = scmp.ne.s32.totalorder %s60, %s61
      %p75 = scmp.eq.s32.totalorder %s27, 1
      %p76 = por %p74, %p75
      %p78 = scmp.ne.s32.totalorder %s61, %s77
      %p79 = scmp.eq.s32.totalorder %s27, 0
      %p80 = por %p78, %p79
      %s82 = sadd.s32 %s81, 1
      %p85 = scmp.eq.s32.totalorder %s21, 1
      %p86 = scmp.ne.s32.totalorder %s81, %s83
      %p87 = scmp.eq.s32.totalorder %s21, 0
      %p88 = por %p86, %p87
      %p89 = scmp.ne.s32.totalorder %s81, %s83
      %p90 = scmp.eq.s32.totalorder %s26, 1
      %p91 = por %p89, %p90
      %p92 = scmp.ne.s32.totalorder %s83, %s84
      %p93 = scmp.eq.s32.totalorder %s26, 0
      %p94 = por %p92, %p93
      %p95 = scmp.ne.s32.totalorder %s83, %s84
      %p96 = scmp.eq.s32.totalorder %s27, 1
      %p97 = por %p95, %p96
      %p99 = scmp.ne.s32.totalorder %s84, %s98
      %p100 = scmp.eq.s32.totalorder %s27, 0
      %p101 = por %p99, %p100
      %s103 = sadd.s32 %s102, 1
      %p106 = scmp.eq.s32.totalorder %s21, 1
      %p107 = scmp.ne.s32.totalorder %s102, %s104
      %p108 = scmp.eq.s32.totalorder %s21, 0
      %p109 = por %p107, %p108
      %p110 = scmp.ne.s32.totalorder %s102, %s104
      %p111 = scmp.eq.s32.totalorder %s26, 1
      %p112 = por %p110, %p111
      %p113 = scmp.ne.s32.totalorder %s104, %s105
      %p114 = scmp.eq.s32.totalorder %s26, 0
      %p115 = por %p113, %p114
      %p116 = scmp.ne.s32.totalorder %s104, %s105
      %p117 = scmp.eq.s32.totalorder %s27, 1
      %p118 = por %p116, %p117
      %p120 = scmp.ne.s32.totalorder %s105, %s119
      %p121 = scmp.eq.s32.totalorder %s27, 0
      %p122 = por %p120, %p121
      %s124 = sadd.s32 %s123, 1
      %p127 = scmp.eq.s32.totalorder %s21, 1
      %p128 = scmp.ne.s32.totalorder %s123, %s125
      %p129 = scmp.eq.s32.totalorder %s21, 0
      %p130 = por %p128, %p129
      %p131 = scmp.ne.s32.totalorder %s123, %s125
      %p132 = scmp.eq.s32.totalorder %s26, 1
      %p133 = por %p131, %p132
      %p134 = scmp.ne.s32.totalorder %s125, %s126
      %p135 = scmp.eq.s32.totalorder %s26, 0
      %p136 = por %p134, %p135
      %p137 = scmp.ne.s32.totalorder %s125, %s126
      %p138 = scmp.eq.s32.totalorder %s27, 1
      %p139 = por %p137, %p138
      %p141 = scmp.ne.s32.totalorder %s126, %s140
      %p142 = scmp.eq.s32.totalorder %s27, 0
      %p143 = por %p141, %p142
      %s145 = sadd.s32 %s144, 1
      %p148 = scmp.eq.s32.totalorder %s21, 1
      %p149 = scmp.ne.s32.totalorder %s144, %s146
      %p150 = scmp.eq.s32.totalorder %s21, 0
      %p151 = por %p149, %p150
      %p152 = scmp.ne.s32.totalorder %s144, %s146
      %p153 = scmp.eq.s32.totalorder %s26, 1
      %p154 = por %p152, %p153
      %p155 = scmp.ne.s32.totalorder %s146, %s147
      %p156 = scmp.eq.s32.totalorder %s26, 0
      %p157 = por %p155, %p156
      %p158 = scmp.ne.s32.totalorder %s146, %s147
      %p159 = scmp.eq.s32.totalorder %s27, 1
      %p160 = por %p158, %p159
      %p162 = scmp.ne.s32.totalorder %s147, %s161
      %p163 = scmp.eq.s32.totalorder %s27, 0
      %p164 = por %p162, %p163
      %s166 = sadd.s32 %s165, 1
      %p169 = scmp.eq.s32.totalorder %s21, 1
      %p170 = scmp.ne.s32.totalorder %s165, %s167
      %p171 = scmp.eq.s32.totalorder %s21, 0
      %p172 = por %p170, %p171
      %p173 = scmp.ne.s32.totalorder %s165, %s167
      %p174 = scmp.eq.s32.totalorder %s26, 1
      %p175 = por %p173, %p174
      %p176 = scmp.ne.s32.totalorder %s167, %s168
      %p177 = scmp.eq.s32.totalorder %s26, 0
      %p178 = por %p176, %p177
      %p179 = scmp.ne.s32.totalorder %s167, %s168
      %p180 = scmp.eq.s32.totalorder %s27, 1
      %p181 = por %p179, %p180
      %p183 = scmp.ne.s32.totalorder %s168, %s182
      %p184 = scmp.eq.s32.totalorder %s27, 0
      %p185 = por %p183, %p184
      %s186 = ssub.s32 %s21, %s28
      %p187 = scmp.eq.s32.totalorder %s186, 0
      %s189 = sadd.s32 %s188, 1
      %s190 = scalar_select %p187, %s188, %s189
      %p193 = pneg %p187
      %p194 = scmp.eq.s32.totalorder %s21, 1
      %p195 = por %p193, %p194
      %p196 = scmp.ne.s32.totalorder %s188, %s191
      %p197 = scmp.eq.s32.totalorder %s21, 0
      %p198 = por %p196, %p197
      %p199 = scmp.ne.s32.totalorder %s188, %s191
      %p200 = scmp.eq.s32.totalorder %s26, 1
      %p201 = por %p199, %p200
      %p202 = scmp.ne.s32.totalorder %s191, %s192
      %p203 = scmp.eq.s32.totalorder %s26, 0
      %p204 = por %p202, %p203
      %p205 = scmp.ne.s32.totalorder %s191, %s192
      %p206 = scmp.eq.s32.totalorder %s27, 1
      %p207 = por %p205, %p206
      %p209 = scmp.ne.s32.totalorder %s192, %s208
      %p210 = scmp.eq.s32.totalorder %s27, 0
      %p211 = por %p209, %p210
      %p212 = scmp.le.s32.totalorder 1, %s21
      %p213 = scmp.lt.s32.totalorder %s21, 3
      %p214 = pnand %p212, %p213
      %p215 = pneg %p214
      // Predicated region
      $region9: #{_video_embedding_forward.1} parent=5 // pred_check
        _
      $region10: #{_video_embedding_forward.1} parent=5 // pred_check_branch
        %217 = sbr.rel (%p214) target = $region12
      $region11: #{_video_embedding_forward.1} parent=5 // pred_region
        %s218 = ssub.s32 %s21, 1
        // Predicated region
        $region13: #{_video_embedding_forward.1} parent=11 // pred_check
          %p219 = pneg %p94
        $region14: #{_video_embedding_forward.1} parent=11 // pred_check_branch
          %221 = sbr.rel (%p219) target = $region16
        $region15: #{_video_embedding_forward.1} parent=11 // pred_region
          %s223 = ssub.s32 6144, 6144
          %224 = vsyncadd [#allocation6], %s223
          %s225 = sshll.u32 [#allocation5], 4
          %s226 = int_to_ptr.vmem [resolvable:$true] %s225
          %231 = dma.hbm_to_vmem [thread:$0]  %s2, 6144, %s226, [#allocation6], 128, 128, 8
        $region16: #{_video_embedding_forward.1} parent=11 // pred_fallthru
          _
        // Predicated region
        $region17: #{_video_embedding_forward.1} parent=11 // pred_check
          %p232 = pneg %p115
        $region18: #{_video_embedding_forward.1} parent=11 // pred_check_branch
          %234 = sbr.rel (%p232) target = $region20
        $region19: #{_video_embedding_forward.1} parent=11 // pred_region
          %s236 = ssub.s32 6144, 6144
          %237 = vsyncadd [#allocation6], %s236
          %s238 = sshll.u32 [#allocation7], 4
          %s239 = int_to_ptr.vmem [resolvable:$true] %s238
          %244 = dma.hbm_to_vmem [thread:$0]  %s3, 6144, %s239, [#allocation6], 192, 192, 12
        $region20: #{_video_embedding_forward.1} parent=11 // pred_fallthru
          _
        // Predicated region
        $region21: #{_video_embedding_forward.1} parent=11 // pred_check
          %p245 = pneg %p136
        $region22: #{_video_embedding_forward.1} parent=11 // pred_check_branch
          %247 = sbr.rel (%p245) target = $region24
        $region23: #{_video_embedding_forward.1} parent=11 // pred_region
          _
        $region24: #{_video_embedding_forward.1} parent=11 // pred_fallthru
          _
        // Predicated region
        $region25: #{_video_embedding_forward.1} parent=11 // pred_check
          %p248 = pneg %p157
        $region26: #{_video_embedding_forward.1} parent=11 // pred_check_branch
          %250 = sbr.rel (%p248) target = $region28
        $region27: #{_video_embedding_forward.1} parent=11 // pred_region
          %s252 = ssub.s32 1536, 1536
          %253 = vsyncadd [#allocation9], %s252
          %s254 = sshll.u32 [#allocation8], 4
          %s255 = int_to_ptr.vmem [resolvable:$true] %s254
          %260 = dma.hbm_to_vmem [thread:$0]  %s5, 1536, %s255, [#allocation9], 192, 192, 12
        $region28: #{_video_embedding_forward.1} parent=11 // pred_fallthru
          _
        // Predicated region
        $region29: #{_video_embedding_forward.1} parent=11 // pred_check
          %p261 = pneg %p178
        $region30: #{_video_embedding_forward.1} parent=11 // pred_check_branch
          %263 = sbr.rel (%p261) target = $region32
        $region31: #{_video_embedding_forward.1} parent=11 // pred_region
          _
        $region32: #{_video_embedding_forward.1} parent=11 // pred_fallthru
          _
      $region12: #{_video_embedding_forward.1} parent=5 // pred_fallthru
        _
      %p264 = scmp.lt.s32.totalorder %s21, 2
      // Predicated region
      $region33: #{_video_embedding_forward.1} parent=5 // pred_check
        %p265 = pneg %p264
      $region34: #{_video_embedding_forward.1} parent=5 // pred_check_branch
        %267 = sbr.rel (%p265) target = $region36
      $region35: #{_video_embedding_forward.1} parent=5 // pred_region
        // Predicated region
        $region37: #{_video_embedding_forward.1} parent=35 // pred_check
          %p268 = pneg %p41
        $region38: #{_video_embedding_forward.1} parent=35 // pred_check_branch
          %270 = sbr.rel (%p268) target = $region40
        $region39: #{_video_embedding_forward.1} parent=35 // pred_region
          %s271 = sand.u32 %s31, 1
          %s272 = scalar_lea.sflag [#allocation3], %s271
          %s273 = sand.u32 %s31, 1
          %s274 = smul.addr %s273, 72
          %s275 = scalar_lea.vmem [#allocation2], %s274
          %s276 = smul.u32 3, %s21
          %s278 = ssub.s32 1152, 1152
          %279 = vsyncadd %s272, %s278
          %s280 = smul.addr %s276, 3
          %s281 = smul.addr %s280, 128
          %s282 = scalar_lea.hbm %s0, %s281
          %s283 = sshll.u32 %s275, 4
          %s284 = int_to_ptr.vmem [resolvable:$true] %s283
          %289 = dma.hbm_to_vmem [thread:$0]  %s282, 1152, %s284, %s272, 384, 384, 24
        $region40: #{_video_embedding_forward.1} parent=35 // pred_fallthru
          _
        // Predicated region
        $region41: #{_video_embedding_forward.1} parent=35 // pred_check
          %p290 = pneg %p67
        $region42: #{_video_embedding_forward.1} parent=35 // pred_check_branch
          %292 = sbr.rel (%p290) target = $region44
        $region43: #{_video_embedding_forward.1} parent=35 // pred_region
          %s293 = smul.u32 3, %s21
          %p294 = scmp.lt.s32.totalorder %s293, 5
          %s295 = scalar_select %p294, %s293, 5
          %s296 = smul.addr %s295, 8
          %s297 = scalar_lea.vmem %s1, %s296
          %s298 = smul.u32 3, %s21
        $region44: #{_video_embedding_forward.1} parent=35 // pred_fallthru
          _
      $region36: #{_video_embedding_forward.1} parent=5 // pred_fallthru
        _
      %p299 = scmp.le.s32.totalorder 1, %s21
      %p300 = scmp.lt.s32.totalorder %s21, 3
      %p301 = pnand %p299, %p300
      %p302 = pneg %p301
      // Predicated region
      $region45: #{_video_embedding_forward.1} parent=5 // pred_check
        _
      $region46: #{_video_embedding_forward.1} parent=5 // pred_check_branch
        %304 = sbr.rel (%p301) target = $region48
      $region47: #{_video_embedding_forward.1} parent=5 // pred_region
        %s305 = ssub.s32 %s21, 1
        %s306 = sand.u32 %s34, 1
        %s307 = scalar_lea.sflag [#allocation3], %s306
        %s308 = sand.u32 %s34, 1
        %s309 = smul.addr %s308, 72
        %s310 = scalar_lea.vmem [#allocation2], %s309
        // Predicated region
        $region49: #{_video_embedding_forward.1} parent=47 // pred_check
          %p311 = pneg %p47
        $region50: #{_video_embedding_forward.1} parent=47 // pred_check_branch
          %313 = sbr.rel (%p311) target = $region52
        $region51: #{_video_embedding_forward.1} parent=47 // pred_region
          %314 = dma.done %s307, 1152
        $region52: #{_video_embedding_forward.1} parent=47 // pred_fallthru
          _
        // Predicated region
        $region53: #{_video_embedding_forward.1} parent=47 // pred_check
          %p315 = pneg %p94
        $region54: #{_video_embedding_forward.1} parent=47 // pred_check_branch
          %317 = sbr.rel (%p315) target = $region56
        $region55: #{_video_embedding_forward.1} parent=47 // pred_region
          %318 = dma.done [#allocation6], 6144
        $region56: #{_video_embedding_forward.1} parent=47 // pred_fallthru
          _
        // Predicated region
        $region57: #{_video_embedding_forward.1} parent=47 // pred_check
          %p319 = pneg %p115
        $region58: #{_video_embedding_forward.1} parent=47 // pred_check_branch
          %321 = sbr.rel (%p319) target = $region60
        $region59: #{_video_embedding_forward.1} parent=47 // pred_region
          %322 = dma.done [#allocation6], 6144
        $region60: #{_video_embedding_forward.1} parent=47 // pred_fallthru
          _
        // Predicated region
        $region61: #{_video_embedding_forward.1} parent=47 // pred_check
          %p323 = pneg %p157
        $region62: #{_video_embedding_forward.1} parent=47 // pred_check_branch
          %325 = sbr.rel (%p323) target = $region64
        $region63: #{_video_embedding_forward.1} parent=47 // pred_region
          %326 = dma.done [#allocation9], 1536
        $region64: #{_video_embedding_forward.1} parent=47 // pred_fallthru
          _
        %s327 = sand.u32 %s34, 1
        %s328 = scalar_lea.sflag [#allocation3], %s327
        %s329 = sand.u32 %s34, 1
        %s330 = smul.addr %s329, 72
        %s331 = scalar_lea.vmem [#allocation2], %s330
        %p332 = pneg %p47
        %p333 = pneg %p44
        %s334 = smul.u32 3, %s26
        %p335 = scmp.lt.s32.totalorder %s334, 5
        %s336 = scalar_select %p335, %s334, 5
        %s337 = smul.addr %s336, 8
        %s338 = scalar_lea.vmem %s1, %s337
        %p339 = pneg %p73
        %p340 = pneg %p70
        %p341 = pneg %p94
        %p342 = pneg %p91
        %p343 = pneg %p115
        %p344 = pneg %p112
        %p345 = pneg %p136
        %p346 = pneg %p133
        %p347 = pneg %p157
        %p348 = pneg %p154
        %p349 = pneg %p178
        %p350 = pneg %p175
        %p351 = pneg %p204
        %p352 = pneg %p201
        %s353 = sand.u32 %s191, 1
        %s354 = scalar_lea.sflag [#allocation4], %s353
        %s355 = sand.u32 %s191, 1
        %s356 = smul.addr %s355, 72
        %s357 = scalar_lea.vmem [#allocation10], %s356
        %s358 = smul.u32 3, %s26
        %s359 = smul.u32 3, %s26
        %p360 = scmp.lt.s32.totalorder %s359, 5
        %s361 = scalar_select %p360, %s359, 5
        %s362 = smul.addr %s361, 8
        %s363 = scalar_lea.vmem %s1, %s362
        %s364 = smul.u32 3, %s26
        %s365 = smul.u32 3, %s26
        %v367 = vld [vmem:[%s6] sm:$0x3]
        %v368 = vld [vmem:[%s6 + $0x2] sm:$0x1]
        %v369 = vld [vmem:[%s6 + $0x3] sm:$0x7]
        %v370 = vld [vmem:[%s6 + $0x6] sm:$0x7]
        %v371 = vld [vmem:[%s6 + $0x9] sm:$0x7]
        %v372 = vld [vmem:[%s310] sm:$0xff]
        %v373 = vld [vmem:[%s310 + $0x8] sm:$0xff]
        %v374 = vld [vmem:[%s310 + $0x10] sm:$0xff]
        %v375 = vld [vmem:[%s310 + $0x18] sm:$0xff]
        %v376 = vld [vmem:[%s310 + $0x20] sm:$0xff]
        %v377 = vld [vmem:[%s310 + $0x28] sm:$0xff]
        %v378 = vld [vmem:[%s310 + $0x30] sm:$0xff]
        %v379 = vld [vmem:[%s310 + $0x38] sm:$0xff]
        %v380 = vld [vmem:[%s310 + $0x40] sm:$0xff]
        %v381 = vpack.c.bf16 %v375, %v372
        %v382 = vpack.c.bf16 %v376, %v373
        %v383 = vpack.c.bf16 %v377, %v374
        %v384 = vpack.c.bf16 %v378, %v378
        %v385 = vpack.c.bf16 %v379, %v379
        %v386 = vpack.c.bf16 %v380, %v380
        %v387 = vld [vmem:[#allocation5] sm:$0xff]
        %v388 = vld [vmem:[#allocation5 + $0x8] sm:$0xff]
        %v389 = vld [vmem:[#allocation5 + $0x10] sm:$0xff]
        %v390 = vld [vmem:[#allocation5 + $0x18] sm:$0xff]
        %v391 = vld [vmem:[#allocation5 + $0x20] sm:$0xff]
        %v392 = vld [vmem:[#allocation5 + $0x28] sm:$0xff]
        %v393 = vld [vmem:[#allocation5 + $0x30] sm:$0xff]
        %v394 = vld [vmem:[#allocation5 + $0x38] sm:$0xff]
        %v395 = vld [vmem:[#allocation5 + $0x40] sm:$0xff]
        %v396 = vld [vmem:[#allocation5 + $0x48] sm:$0xff]
        %v397 = vld [vmem:[#allocation5 + $0x50] sm:$0xff]
        %v398 = vld [vmem:[#allocation5 + $0x58] sm:$0xff]
        %v399 = vld [vmem:[#allocation5 + $0x60] sm:$0xff]
        %v400 = vld [vmem:[#allocation5 + $0x68] sm:$0xff]
        %v401 = vld [vmem:[#allocation5 + $0x70] sm:$0xff]
        %v402 = vld [vmem:[#allocation5 + $0x78] sm:$0xff]
        %v403 = vld [vmem:[#allocation5 + $0x80] sm:$0xff]
        %v404 = vld [vmem:[#allocation5 + $0x88] sm:$0xff]
        %v405 = vld [vmem:[#allocation5 + $0x90] sm:$0xff]
        %v406 = vld [vmem:[#allocation5 + $0x98] sm:$0xff]
        %v407 = vld [vmem:[#allocation5 + $0xa0] sm:$0xff]
        %v408 = vld [vmem:[#allocation5 + $0xa8] sm:$0xff]
        %v409 = vld [vmem:[#allocation5 + $0xb0] sm:$0xff]
        %v410 = vld [vmem:[#allocation5 + $0xb8] sm:$0xff]
        %v411 = vld [vmem:[#allocation5 + $0xc0] sm:$0xff]
        %v412 = vld [vmem:[#allocation5 + $0xc8] sm:$0xff]
        %v413 = vld [vmem:[#allocation5 + $0xd0] sm:$0xff]
        %v414 = vld [vmem:[#allocation5 + $0xd8] sm:$0xff]
        %v415 = vld [vmem:[#allocation5 + $0xe0] sm:$0xff]
        %v416 = vld [vmem:[#allocation5 + $0xe8] sm:$0xff]
        %v417 = vld [vmem:[#allocation5 + $0xf0] sm:$0xff]
        %v418 = vld [vmem:[#allocation5 + $0xf8] sm:$0xff]
        %v419 = vld [vmem:[#allocation5 + $0x100] sm:$0xff]
        %v420 = vld [vmem:[#allocation5 + $0x108] sm:$0xff]
        %v421 = vld [vmem:[#allocation5 + $0x110] sm:$0xff]
        %v422 = vld [vmem:[#allocation5 + $0x118] sm:$0xff]
        %v423 = vld [vmem:[#allocation5 + $0x120] sm:$0xff]
        %v424 = vld [vmem:[#allocation5 + $0x128] sm:$0xff]
        %v425 = vld [vmem:[#allocation5 + $0x130] sm:$0xff]
        %v426 = vld [vmem:[#allocation5 + $0x138] sm:$0xff]
        %v427 = vld [vmem:[#allocation5 + $0x140] sm:$0xff]
        %v428 = vld [vmem:[#allocation5 + $0x148] sm:$0xff]
        %v429 = vld [vmem:[#allocation5 + $0x150] sm:$0xff]
        %v430 = vld [vmem:[#allocation5 + $0x158] sm:$0xff]
        %v431 = vld [vmem:[#allocation5 + $0x160] sm:$0xff]
        %v432 = vld [vmem:[#allocation5 + $0x168] sm:$0xff]
        %v433 = vld [vmem:[#allocation5 + $0x170] sm:$0xff]
        %v434 = vld [vmem:[#allocation5 + $0x178] sm:$0xff]
        %v436 = vlaneseq
        %v437 = vshrl.u32 %v436, 7
        %v438 = vsub.s32 0, %v437
        %v439 = vrot.slane %v367, %v438
        %v440 = vlaneseq
        %v441 = vshrl.u32 %v440, 7
        %v442 = vsub.s32 1, %v441
        %v443 = vrot.slane %v367, %v442
        %v494 = vunpack.c.l.b16 %v387
        %v495 = vunpack.c.h.b16 %v387
        %v496 = vunpack.c.l.b16 %v388
        %v497 = vunpack.c.h.b16 %v388
        %v498 = vunpack.c.l.b16 %v389
        %v499 = vunpack.c.h.b16 %v389
        %v500 = vunpack.c.l.b16 %v390
        %v501 = vunpack.c.h.b16 %v390
        %v502 = vunpack.c.l.b16 %v391
        %v503 = vunpack.c.h.b16 %v391
        %v504 = vunpack.c.l.b16 %v392
        %v505 = vunpack.c.h.b16 %v392
        %v506 = vunpack.c.l.b16 %v393
        %v507 = vunpack.c.h.b16 %v393
        %v508 = vunpack.c.l.b16 %v394
        %v509 = vunpack.c.h.b16 %v394
        %v510 = vunpack.c.l.b16 %v395
        %v511 = vunpack.c.h.b16 %v395
        %v512 = vunpack.c.l.b16 %v396
        %v513 = vunpack.c.h.b16 %v396
        %v514 = vunpack.c.l.b16 %v397
        %v515 = vunpack.c.h.b16 %v397
        %v516 = vunpack.c.l.b16 %v398
        %v517 = vunpack.c.h.b16 %v398
        %v518 = vunpack.c.l.b16 %v399
        %v519 = vunpack.c.h.b16 %v399
        %v520 = vunpack.c.l.b16 %v400
        %v521 = vunpack.c.h.b16 %v400
        %v522 = vunpack.c.l.b16 %v401
        %v523 = vunpack.c.h.b16 %v401
        %v524 = vunpack.c.l.b16 %v402
        %v525 = vunpack.c.h.b16 %v402
        %v526 = vunpack.c.l.b16 %v403
        %v527 = vunpack.c.h.b16 %v403
        %v528 = vunpack.c.l.b16 %v404
        %v529 = vunpack.c.h.b16 %v404
        %v530 = vunpack.c.l.b16 %v405
        %v531 = vunpack.c.h.b16 %v405
        %v532 = vunpack.c.l.b16 %v406
        %v533 = vunpack.c.h.b16 %v406
        %v534 = vunpack.c.l.b16 %v407
        %v535 = vunpack.c.h.b16 %v407
        %v536 = vunpack.c.l.b16 %v408
        %v537 = vunpack.c.h.b16 %v408
        %v538 = vunpack.c.l.b16 %v409
        %v539 = vunpack.c.h.b16 %v409
        %v540 = vunpack.c.l.b16 %v410
        %v541 = vunpack.c.h.b16 %v410
        %v542 = vunpack.c.l.b16 %v411
        %v543 = vunpack.c.h.b16 %v411
        %v544 = vunpack.c.l.b16 %v412
        %v545 = vunpack.c.h.b16 %v412
        %v546 = vunpack.c.l.b16 %v413
        %v547 = vunpack.c.h.b16 %v413
        %v548 = vunpack.c.l.b16 %v414
        %v549 = vunpack.c.h.b16 %v414
        %v550 = vunpack.c.l.b16 %v415
        %v551 = vunpack.c.h.b16 %v415
        %v552 = vunpack.c.l.b16 %v416
        %v553 = vunpack.c.h.b16 %v416
        %v554 = vunpack.c.l.b16 %v417
        %v555 = vunpack.c.h.b16 %v417
        %v556 = vunpack.c.l.b16 %v418
        %v557 = vunpack.c.h.b16 %v418
        %v558 = vunpack.c.l.b16 %v419
        %v559 = vunpack.c.h.b16 %v419
        %v560 = vunpack.c.l.b16 %v420
        %v561 = vunpack.c.h.b16 %v420
        %v562 = vunpack.c.l.b16 %v421
        %v563 = vunpack.c.h.b16 %v421
        %v564 = vunpack.c.l.b16 %v422
        %v565 = vunpack.c.h.b16 %v422
        %v566 = vunpack.c.l.b16 %v423
        %v567 = vunpack.c.h.b16 %v423
        %v568 = vunpack.c.l.b16 %v424
        %v569 = vunpack.c.h.b16 %v424
        %v570 = vunpack.c.l.b16 %v425
        %v571 = vunpack.c.h.b16 %v425
        %v572 = vunpack.c.l.b16 %v426
        %v573 = vunpack.c.h.b16 %v426
        %v574 = vunpack.c.l.b16 %v427
        %v575 = vunpack.c.h.b16 %v427
        %v576 = vunpack.c.l.b16 %v428
        %v577 = vunpack.c.h.b16 %v428
        %v578 = vunpack.c.l.b16 %v429
        %v579 = vunpack.c.h.b16 %v429
        %v580 = vunpack.c.l.b16 %v430
        %v581 = vunpack.c.h.b16 %v430
        %v582 = vunpack.c.l.b16 %v431
        %v583 = vunpack.c.h.b16 %v431
        %v584 = vunpack.c.l.b16 %v432
        %v585 = vunpack.c.h.b16 %v432
        %v586 = vunpack.c.l.b16 %v433
        %v587 = vunpack.c.h.b16 %v433
        %v588 = vunpack.c.l.b16 %v434
        %v589 = vunpack.c.h.b16 %v434
        %v590 = vpack.c.b16 %v496, %v494
        %v591 = vpack.c.b16 %v497, %v495
        %v592 = vpack.c.b16 %v500, %v498
        %v593 = vpack.c.b16 %v501, %v499
        %v594 = vpack.c.b16 %v504, %v502
        %v595 = vpack.c.b16 %v505, %v503
        %v596 = vpack.c.b16 %v508, %v506
        %v597 = vpack.c.b16 %v509, %v507
        %v598 = vpack.c.b16 %v512, %v510
        %v599 = vpack.c.b16 %v513, %v511
        %v600 = vpack.c.b16 %v516, %v514
        %v601 = vpack.c.b16 %v517, %v515
        %v602 = vpack.c.b16 %v520, %v518
        %v603 = vpack.c.b16 %v521, %v519
        %v604 = vpack.c.b16 %v524, %v522
        %v605 = vpack.c.b16 %v525, %v523
        %v606 = vpack.c.b16 %v528, %v526
        %v607 = vpack.c.b16 %v529, %v527
        %v608 = vpack.c.b16 %v532, %v530
        %v609 = vpack.c.b16 %v533, %v531
        %v610 = vpack.c.b16 %v536, %v534
        %v611 = vpack.c.b16 %v537, %v535
        %v612 = vpack.c.b16 %v540, %v538
        %v613 = vpack.c.b16 %v541, %v539
        %v614 = vpack.c.b16 %v544, %v542
        %v615 = vpack.c.b16 %v545, %v543
        %v616 = vpack.c.b16 %v548, %v546
        %v617 = vpack.c.b16 %v549, %v547
        %v618 = vpack.c.b16 %v552, %v550
        %v619 = vpack.c.b16 %v553, %v551
        %v620 = vpack.c.b16 %v556, %v554
        %v621 = vpack.c.b16 %v557, %v555
        %v622 = vpack.c.b16 %v560, %v558
        %v623 = vpack.c.b16 %v561, %v559
        %v624 = vpack.c.b16 %v564, %v562
        %v625 = vpack.c.b16 %v565, %v563
        %v626 = vpack.c.b16 %v568, %v566
        %v627 = vpack.c.b16 %v569, %v567
        %v628 = vpack.c.b16 %v572, %v570
        %v629 = vpack.c.b16 %v573, %v571
        %v630 = vpack.c.b16 %v576, %v574
        %v631 = vpack.c.b16 %v577, %v575
        %v632 = vpack.c.b16 %v580, %v578
        %v633 = vpack.c.b16 %v581, %v579
        %v634 = vpack.c.b16 %v584, %v582
        %v635 = vpack.c.b16 %v585, %v583
        %v636 = vpack.c.b16 %v588, %v586
        %v637 = vpack.c.b16 %v589, %v587
        %686 = vmatprep.subr.bf16.mxu0 %v605
        %687 = vmatpush1.bf16.msra.mxu0 %v604
        %688 = vmatprep.subr.bf16.mxu0 %v603
        %689 = vmatpush1.bf16.msra.mxu0 %v602
        %690 = vmatprep.subr.bf16.mxu0 %v601
        %691 = vmatpush1.bf16.msra.mxu0 %v600
        %692 = vmatprep.subr.bf16.mxu0 %v599
        %693 = vmatpush1.bf16.msra.mxu0 %v598
        %694 = vmatprep.subr.bf16.mxu0 %v597
        %695 = vmatpush1.bf16.msra.mxu0 %v596
        %696 = vmatprep.subr.bf16.mxu0 %v595
        %697 = vmatpush1.bf16.msra.mxu0 %v594
        %698 = vmatprep.subr.bf16.mxu0 %v593
        %699 = vmatpush1.bf16.msra.mxu0 %v592
        %700 = vmatprep.subr.bf16.mxu0 %v591
        %701 = vmatpush1.bf16.msra.mxu0 %v590
        %702 = vmatprep.subr.bf16.mxu0 %v621
        %703 = vmatpush2.bf16.msra.mxu0 %v620
        %704 = vmatprep.subr.bf16.mxu0 %v619
        %705 = vmatpush2.bf16.msra.mxu0 %v618
        %706 = vmatprep.subr.bf16.mxu0 %v617
        %707 = vmatpush2.bf16.msra.mxu0 %v616
        %708 = vmatprep.subr.bf16.mxu0 %v615
        %709 = vmatpush2.bf16.msra.mxu0 %v614
        %710 = vmatprep.subr.bf16.mxu0 %v613
        %711 = vmatpush2.bf16.msra.mxu0 %v612
        %712 = vmatprep.subr.bf16.mxu0 %v611
        %713 = vmatpush2.bf16.msra.mxu0 %v610
        %714 = vmatprep.subr.bf16.mxu0 %v609
        %715 = vmatpush2.bf16.msra.mxu0 %v608
        %716 = vmatprep.subr.bf16.mxu0 %v607
        %717 = vmatpush2.bf16.msra.mxu0 %v606
        %718 = vmatprep.mubr.bf16.mxu0 %v382
        %719 = vmatmul.mubr.bf16.gmra.mxu0 %v381
        %v720 = vpop.f32.mrf.mxu0
        %v721 = vadd.f32 %v439, %v720
        %v722 = vpop.f32.mrf.mxu0
        %v723 = vadd.f32 %v443, %v722
        %v724 = vpop.f32.mrf.mxu0
        %v725 = vadd.f32 %v439, %v724
        %v726 = vpop.f32.mrf.mxu0
        %v727 = vadd.f32 %v443, %v726
        %728 = vmatprep.mubr.bf16.mxu0 %v385
        %729 = vmatmul.mubr.bf16.gmra.mxu0 %v384
        %v730 = vpop.f32.mrf.mxu0
        %v731 = vadd.f32 %v439, %v730
        %v732 = vpop.f32.mrf.mxu0
        %v733 = vadd.f32 %v443, %v732
        %v734 = vpop.f32.mrf.mxu0
        %v735 = vpop.f32.mrf.mxu0
        %736 = vdwg.mxu0
        %737 = vmatprep.subr.bf16.mxu0 %v637
        %738 = vmatpush1.bf16.msra.mxu0 %v636
        %739 = vmatprep.subr.bf16.mxu0 %v635
        %740 = vmatpush1.bf16.msra.mxu0 %v634
        %741 = vmatprep.subr.bf16.mxu0 %v633
        %742 = vmatpush1.bf16.msra.mxu0 %v632
        %743 = vmatprep.subr.bf16.mxu0 %v631
        %744 = vmatpush1.bf16.msra.mxu0 %v630
        %745 = vmatprep.subr.bf16.mxu0 %v629
        %746 = vmatpush1.bf16.msra.mxu0 %v628
        %747 = vmatprep.subr.bf16.mxu0 %v627
        %748 = vmatpush1.bf16.msra.mxu0 %v626
        %749 = vmatprep.subr.bf16.mxu0 %v625
        %750 = vmatpush1.bf16.msra.mxu0 %v624
        %751 = vmatprep.subr.bf16.mxu0 %v623
        %752 = vmatpush1.bf16.msra.mxu0 %v622
        %753 = vmatprep.subr.bf16.mxu0 0
        %754 = vmatpush2.bf16.msra.mxu0 0
        %755 = vmatprep.subr.bf16.mxu0 0
        %756 = vmatpush2.bf16.msra.mxu0 0
        %757 = vmatprep.subr.bf16.mxu0 0
        %758 = vmatpush2.bf16.msra.mxu0 0
        %759 = vmatprep.subr.bf16.mxu0 0
        %760 = vmatpush2.bf16.msra.mxu0 0
        %761 = vmatprep.subr.bf16.mxu0 0
        %762 = vmatpush2.bf16.msra.mxu0 0
        %763 = vmatprep.subr.bf16.mxu0 0
        %764 = vmatpush2.bf16.msra.mxu0 0
        %765 = vmatprep.subr.bf16.mxu0 0
        %766 = vmatpush2.bf16.msra.mxu0 0
        %767 = vmatprep.subr.bf16.mxu0 0
        %768 = vmatpush2.bf16.msra.mxu0 0
        %769 = vmatprep.mubr.bf16.mxu0 0
        %770 = vmatmul.mubr.bf16.gmra.mxu0 %v383
        %v771 = vpop.f32.mrf.mxu0
        %v772 = vadd.f32 %v721, %v771
        %v773 = vpop.f32.mrf.mxu0
        %v774 = vadd.f32 %v723, %v773
        %v775 = vpop.f32.mrf.mxu0
        %v776 = vadd.f32 %v725, %v775
        %v777 = vpop.f32.mrf.mxu0
        %v778 = vadd.f32 %v727, %v777
        %779 = vmatprep.mubr.bf16.mxu0 0
        %780 = vmatmul.mubr.bf16.gmra.mxu0 %v386
        %v781 = vpop.f32.mrf.mxu0
        %v782 = vadd.f32 %v731, %v781
        %v783 = vpop.f32.mrf.mxu0
        %v784 = vadd.f32 %v733, %v783
        %v785 = vpop.f32.mrf.mxu0
        %v786 = vpop.f32.mrf.mxu0
        %787 = vdwg.mxu0
        %v788 = vmax.f32 %v772, 0.0
        %v789 = vmax.f32 %v774, 0.0
        %v790 = vmax.f32 %v776, 0.0
        %v791 = vmax.f32 %v778, 0.0
        %v792 = vmax.f32 %v782, 0.0
        %v793 = vmax.f32 %v784, 0.0
        %v794 = vpack.c.bf16 %v790, %v788
        %v795 = vpack.c.bf16 %v791, %v789
        %v796 = vpack.c.bf16 %v792, %v792
        %v797 = vpack.c.bf16 %v793, %v793
        %v798 = vld [vmem:[#allocation7] sm:$0xff]
        %v799 = vld [vmem:[#allocation7 + $0x8] sm:$0xf]
        %v800 = vld [vmem:[#allocation7 + $0xc] sm:$0xff]
        %v801 = vld [vmem:[#allocation7 + $0x14] sm:$0xf]
        %v802 = vld [vmem:[#allocation7 + $0x18] sm:$0xff]
        %v803 = vld [vmem:[#allocation7 + $0x20] sm:$0xf]
        %v804 = vld [vmem:[#allocation7 + $0x24] sm:$0xff]
        %v805 = vld [vmem:[#allocation7 + $0x2c] sm:$0xf]
        %v806 = vld [vmem:[#allocation7 + $0x30] sm:$0xff]
        %v807 = vld [vmem:[#allocation7 + $0x38] sm:$0xf]
        %v808 = vld [vmem:[#allocation7 + $0x3c] sm:$0xff]
        %v809 = vld [vmem:[#allocation7 + $0x44] sm:$0xf]
        %v810 = vld [vmem:[#allocation7 + $0x48] sm:$0xff]
        %v811 = vld [vmem:[#allocation7 + $0x50] sm:$0xf]
        %v812 = vld [vmem:[#allocation7 + $0x54] sm:$0xff]
        %v813 = vld [vmem:[#allocation7 + $0x5c] sm:$0xf]
        %v814 = vld [vmem:[#allocation7 + $0x60] sm:$0xff]
        %v815 = vld [vmem:[#allocation7 + $0x68] sm:$0xf]
        %v816 = vld [vmem:[#allocation7 + $0x6c] sm:$0xff]
        %v817 = vld [vmem:[#allocation7 + $0x74] sm:$0xf]
        %v818 = vld [vmem:[#allocation7 + $0x78] sm:$0xff]
        %v819 = vld [vmem:[#allocation7 + $0x80] sm:$0xf]
        %v820 = vld [vmem:[#allocation7 + $0x84] sm:$0xff]
        %v821 = vld [vmem:[#allocation7 + $0x8c] sm:$0xf]
        %v822 = vld [vmem:[#allocation7 + $0x90] sm:$0xff]
        %v823 = vld [vmem:[#allocation7 + $0x98] sm:$0xf]
        %v824 = vld [vmem:[#allocation7 + $0x9c] sm:$0xff]
        %v825 = vld [vmem:[#allocation7 + $0xa4] sm:$0xf]
        %v826 = vld [vmem:[#allocation7 + $0xa8] sm:$0xff]
        %v827 = vld [vmem:[#allocation7 + $0xb0] sm:$0xf]
        %v828 = vld [vmem:[#allocation7 + $0xb4] sm:$0xff]
        %v829 = vld [vmem:[#allocation7 + $0xbc] sm:$0xf]
        %v830 = vld [vmem:[#allocation7 + $0xc0] sm:$0xff]
        %v831 = vld [vmem:[#allocation7 + $0xc8] sm:$0xf]
        %v832 = vld [vmem:[#allocation7 + $0xcc] sm:$0xff]
        %v833 = vld [vmem:[#allocation7 + $0xd4] sm:$0xf]
        %v834 = vld [vmem:[#allocation7 + $0xd8] sm:$0xff]
        %v835 = vld [vmem:[#allocation7 + $0xe0] sm:$0xf]
        %v836 = vld [vmem:[#allocation7 + $0xe4] sm:$0xff]
        %v837 = vld [vmem:[#allocation7 + $0xec] sm:$0xf]
        %v838 = vld [vmem:[#allocation7 + $0xf0] sm:$0xff]
        %v839 = vld [vmem:[#allocation7 + $0xf8] sm:$0xf]
        %v840 = vld [vmem:[#allocation7 + $0xfc] sm:$0xff]
        %v841 = vld [vmem:[#allocation7 + $0x104] sm:$0xf]
        %v842 = vld [vmem:[#allocation7 + $0x108] sm:$0xff]
        %v843 = vld [vmem:[#allocation7 + $0x110] sm:$0xf]
        %v844 = vld [vmem:[#allocation7 + $0x114] sm:$0xff]
        %v845 = vld [vmem:[#allocation7 + $0x11c] sm:$0xf]
        %v846 = vld [vmem:[#allocation7 + $0x120] sm:$0xff]
        %v847 = vld [vmem:[#allocation7 + $0x128] sm:$0xf]
        %v848 = vld [vmem:[#allocation7 + $0x12c] sm:$0xff]
        %v849 = vld [vmem:[#allocation7 + $0x134] sm:$0xf]
        %v850 = vld [vmem:[#allocation7 + $0x138] sm:$0xff]
        %v851 = vld [vmem:[#allocation7 + $0x140] sm:$0xf]
        %v852 = vld [vmem:[#allocation7 + $0x144] sm:$0xff]
        %v853 = vld [vmem:[#allocation7 + $0x14c] sm:$0xf]
        %v854 = vld [vmem:[#allocation7 + $0x150] sm:$0xff]
        %v855 = vld [vmem:[#allocation7 + $0x158] sm:$0xf]
        %v856 = vld [vmem:[#allocation7 + $0x15c] sm:$0xff]
        %v857 = vld [vmem:[#allocation7 + $0x164] sm:$0xf]
        %v858 = vld [vmem:[#allocation7 + $0x168] sm:$0xff]
        %v859 = vld [vmem:[#allocation7 + $0x170] sm:$0xf]
        %v860 = vld [vmem:[#allocation7 + $0x174] sm:$0xff]
        %v861 = vld [vmem:[#allocation7 + $0x17c] sm:$0xf]
        %v862 = vld [vmem:[%s363] sm:$0xff]
        %v863 = vld [vmem:[%s363 + $0x8] sm:$0xff]
        %v864 = vld [vmem:[%s363 + $0x10] sm:$0xff]
        %v865 = vld [vmem:[%s4] sm:$0x1f]
        %867 = vset.pattern.permute.xlu0 0
        %868 = vperm.xlu0 %867, %v862
        %v869 = vpop.permute.xlu0 %868
        %872 = vset.pattern.permute.xlu0 0
        %873 = vperm.xlu0 %872, %v863
        %v874 = vpop.permute.xlu0 %873
        %877 = vset.pattern.permute.xlu0 0
        %878 = vperm.xlu0 %877, %v864
        %v879 = vpop.permute.xlu0 %878
        %v881 = vlaneseq
        %v882 = vshrl.u32 %v881, 7
        %v883 = vsub.s32 0, %v882
        %v884 = vrot.slane %v865, %v883
        %v885 = vmul.f32 %v869, %v884
        %v886 = vmul.f32 %v874, %v884
        %v887 = vmul.f32 %v879, %v884
        %888 = vset.pattern.permute.xlu0 1
        %889 = vperm.xlu0 %888, %v862
        %v890 = vpop.permute.xlu0 %889
        %892 = vset.pattern.permute.xlu0 1
        %893 = vperm.xlu0 %892, %v863
        %v894 = vpop.permute.xlu0 %893
        %896 = vset.pattern.permute.xlu0 1
        %897 = vperm.xlu0 %896, %v864
        %v898 = vpop.permute.xlu0 %897
        %v900 = vlaneseq
        %v901 = vshrl.u32 %v900, 7
        %v902 = vsub.s32 1, %v901
        %v903 = vrot.slane %v865, %v902
        %v904 = vmul.f32 %v890, %v903
        %v905 = vmul.f32 %v894, %v903
        %v906 = vmul.f32 %v898, %v903
        %v907 = vadd.f32 %v885, %v904
        %v908 = vadd.f32 %v886, %v905
        %v909 = vadd.f32 %v887, %v906
        %910 = vset.pattern.permute.xlu0 2
        %911 = vperm.xlu0 %910, %v862
        %v912 = vpop.permute.xlu0 %911
        %914 = vset.pattern.permute.xlu0 2
        %915 = vperm.xlu0 %914, %v863
        %v916 = vpop.permute.xlu0 %915
        %918 = vset.pattern.permute.xlu0 2
        %919 = vperm.xlu0 %918, %v864
        %v920 = vpop.permute.xlu0 %919
        %v922 = vlaneseq
        %v923 = vshrl.u32 %v922, 7
        %v924 = vsub.s32 2, %v923
        %v925 = vrot.slane %v865, %v924
        %v926 = vmul.f32 %v912, %v925
        %v927 = vmul.f32 %v916, %v925
        %v928 = vmul.f32 %v920, %v925
        %v929 = vadd.f32 %v907, %v926
        %v930 = vadd.f32 %v908, %v927
        %v931 = vadd.f32 %v909, %v928
        %932 = vset.pattern.permute.xlu0 3
        %933 = vperm.xlu0 %932, %v862
        %v934 = vpop.permute.xlu0 %933
        %936 = vset.pattern.permute.xlu0 3
        %937 = vperm.xlu0 %936, %v863
        %v938 = vpop.permute.xlu0 %937
        %940 = vset.pattern.permute.xlu0 3
        %941 = vperm.xlu0 %940, %v864
        %v942 = vpop.permute.xlu0 %941
        %v944 = vlaneseq
        %v945 = vshrl.u32 %v944, 7
        %v946 = vsub.s32 3, %v945
        %v947 = vrot.slane %v865, %v946
        %v948 = vmul.f32 %v934, %v947
        %v949 = vmul.f32 %v938, %v947
        %v950 = vmul.f32 %v942, %v947
        %v951 = vadd.f32 %v929, %v948
        %v952 = vadd.f32 %v930, %v949
        %v953 = vadd.f32 %v931, %v950
        %954 = vset.pattern.permute.xlu0 4
        %955 = vperm.xlu0 %954, %v862
        %v956 = vpop.permute.xlu0 %955
        %958 = vset.pattern.permute.xlu0 4
        %959 = vperm.xlu0 %958, %v863
        %v960 = vpop.permute.xlu0 %959
        %962 = vset.pattern.permute.xlu0 4
        %963 = vperm.xlu0 %962, %v864
        %v964 = vpop.permute.xlu0 %963
        %v966 = vlaneseq
        %v967 = vshrl.u32 %v966, 7
        %v968 = vsub.s32 4, %v967
        %v969 = vrot.slane %v865, %v968
        %v970 = vmul.f32 %v956, %v969
        %v971 = vmul.f32 %v960, %v969
        %v972 = vmul.f32 %v964, %v969
        %v973 = vadd.f32 %v951, %v970
        %v974 = vadd.f32 %v952, %v971
        %v975 = vadd.f32 %v953, %v972
        %v977 = vlaneseq
        %v978 = vshrl.u32 %v977, 7
        %v979 = vsub.s32 0, %v978
        %v980 = vrot.slane %v368, %v979
        %v982 = vadd.f32 %v973, %v980
        %v983 = vadd.f32 %v974, %v980
        %v984 = vadd.f32 %v975, %v980
        %v985 = vmax.f32 %v982, 0.0
        %v986 = vmax.f32 %v983, 0.0
        %v987 = vmax.f32 %v984, 0.0
        %v988 = vpack.c.bf16 %v986, %v985
        %v989 = vpack.c.bf16 %v987, %v987
        %v990 = vld [vmem:[#allocation8] sm:$0xff]
        %v991 = vld [vmem:[#allocation8 + $0x8] sm:$0xf]
        %v992 = vld [vmem:[#allocation8 + $0xc] sm:$0xff]
        %v993 = vld [vmem:[#allocation8 + $0x14] sm:$0xf]
        %v994 = vld [vmem:[#allocation8 + $0x18] sm:$0xff]
        %v995 = vld [vmem:[#allocation8 + $0x20] sm:$0xf]
        %v996 = vld [vmem:[#allocation8 + $0x24] sm:$0xff]
        %v997 = vld [vmem:[#allocation8 + $0x2c] sm:$0xf]
        %v998 = vld [vmem:[#allocation8 + $0x30] sm:$0xff]
        %v999 = vld [vmem:[#allocation8 + $0x38] sm:$0xf]
        %v1000 = vld [vmem:[#allocation8 + $0x3c] sm:$0xff]
        %v1001 = vld [vmem:[#allocation8 + $0x44] sm:$0xf]
        %v1002 = vld [vmem:[#allocation8 + $0x48] sm:$0xff]
        %v1003 = vld [vmem:[#allocation8 + $0x50] sm:$0xf]
        %v1004 = vld [vmem:[#allocation8 + $0x54] sm:$0xff]
        %v1005 = vld [vmem:[#allocation8 + $0x5c] sm:$0xf]
        %v1022 = vunpack.c.l.b16 %v990
        %v1023 = vunpack.c.h.b16 %v990
        %v1024 = vunpack.c.l.b16 %v991
        %v1025 = vunpack.c.l.b16 %v992
        %v1026 = vunpack.c.h.b16 %v992
        %v1027 = vunpack.c.l.b16 %v993
        %v1028 = vunpack.c.l.b16 %v994
        %v1029 = vunpack.c.h.b16 %v994
        %v1030 = vunpack.c.l.b16 %v995
        %v1031 = vunpack.c.l.b16 %v996
        %v1032 = vunpack.c.h.b16 %v996
        %v1033 = vunpack.c.l.b16 %v997
        %v1034 = vunpack.c.l.b16 %v998
        %v1035 = vunpack.c.h.b16 %v998
        %v1036 = vunpack.c.l.b16 %v999
        %v1037 = vunpack.c.l.b16 %v1000
        %v1038 = vunpack.c.h.b16 %v1000
        %v1039 = vunpack.c.l.b16 %v1001
        %v1040 = vunpack.c.l.b16 %v1002
        %v1041 = vunpack.c.h.b16 %v1002
        %v1042 = vunpack.c.l.b16 %v1003
        %v1043 = vunpack.c.l.b16 %v1004
        %v1044 = vunpack.c.h.b16 %v1004
        %v1045 = vunpack.c.l.b16 %v1005
        %v1046 = vpack.c.b16 %v1025, %v1022
        %v1047 = vpack.c.b16 %v1026, %v1023
        %v1048 = vpack.c.b16 %v1027, %v1024
        %v1049 = vpack.c.b16 %v1031, %v1028
        %v1050 = vpack.c.b16 %v1032, %v1029
        %v1051 = vpack.c.b16 %v1033, %v1030
        %v1052 = vpack.c.b16 %v1037, %v1034
        %v1053 = vpack.c.b16 %v1038, %v1035
        %v1054 = vpack.c.b16 %v1039, %v1036
        %v1055 = vpack.c.b16 %v1043, %v1040
        %v1056 = vpack.c.b16 %v1044, %v1041
        %v1057 = vpack.c.b16 %v1045, %v1042
        %vm1070 = vcmask 523264
        %v1072 = vsel %vm1070, %v988, 0
        %v1075 = vsel %vm1070, %v989, 0
        %1077 = vmatprep.subr.bf16.mxu0 0
        %1078 = vmatpush1.bf16.msra.mxu0 0
        %1079 = vmatprep.subr.bf16.mxu0 0
        %1080 = vmatpush1.bf16.msra.mxu0 0
        %1081 = vmatprep.subr.bf16.mxu0 0
        %1082 = vmatpush1.bf16.msra.mxu0 0
        %1083 = vmatprep.subr.bf16.mxu0 0
        %1084 = vmatpush1.bf16.msra.mxu0 0
        %1085 = vmatprep.subr.bf16.mxu0 %v1056
        %1086 = vmatpush1.bf16.msra.mxu0 %v1055
        %1087 = vmatprep.subr.bf16.mxu0 %v1053
        %1088 = vmatpush1.bf16.msra.mxu0 %v1052
        %1089 = vmatprep.subr.bf16.mxu0 %v1050
        %1090 = vmatpush1.bf16.msra.mxu0 %v1049
        %1091 = vmatprep.subr.bf16.mxu0 %v1047
        %1092 = vmatpush1.bf16.msra.mxu0 %v1046
        %1093 = vmatprep.subr.bf16.mxu0 0
        %1094 = vmatpush2.bf16.msra.mxu0 0
        %1095 = vmatprep.subr.bf16.mxu0 0
        %1096 = vmatpush2.bf16.msra.mxu0 0
        %1097 = vmatprep.subr.bf16.mxu0 0
        %1098 = vmatpush2.bf16.msra.mxu0 0
        %1099 = vmatprep.subr.bf16.mxu0 0
        %1100 = vmatpush2.bf16.msra.mxu0 0
        %1101 = vmatprep.subr.bf16.mxu0 0
        %1102 = vmatpush2.bf16.msra.mxu0 0
        %1103 = vmatprep.subr.bf16.mxu0 0
        %1104 = vmatpush2.bf16.msra.mxu0 0
        %1105 = vmatprep.subr.bf16.mxu0 0
        %1106 = vmatpush2.bf16.msra.mxu0 0
        %1107 = vmatprep.subr.bf16.mxu0 0
        %1108 = vmatpush2.bf16.msra.mxu0 0
        %1109 = vmatprep.mubr.bf16.mxu0 0
        %1110 = vmatmul.mubr.bf16.gmra.mxu0 %v1072
        %v1111 = vpop.f32.mrf.mxu0
        %v1112 = vadd.f32 0.0, %v1111
        %v1113 = vpop.f32.mrf.mxu0
        %v1114 = vadd.f32 0.0, %v1113
        %v1115 = vpop.f32.mrf.mxu0
        %v1116 = vadd.f32 0.0, %v1115
        %v1117 = vpop.f32.mrf.mxu0
        %v1118 = vadd.f32 0.0, %v1117
        %1119 = vmatprep.mubr.bf16.mxu0 0
        %1120 = vmatmul.mubr.bf16.gmra.mxu0 %v1075
        %v1121 = vpop.f32.mrf.mxu0
        %v1122 = vadd.f32 0.0, %v1121
        %v1123 = vpop.f32.mrf.mxu0
        %v1124 = vadd.f32 0.0, %v1123
        %v1125 = vpop.f32.mrf.mxu0
        %v1126 = vpop.f32.mrf.mxu0
        %1127 = vdwg.mxu0
        %1128 = vmatprep.subr.bf16.mxu0 0
        %1129 = vmatpush1.bf16.msra.mxu0 0
        %1130 = vmatprep.subr.bf16.mxu0 0
        %1131 = vmatpush1.bf16.msra.mxu0 0
        %1132 = vmatprep.subr.bf16.mxu0 0
        %1133 = vmatpush1.bf16.msra.mxu0 0
        %1134 = vmatprep.subr.bf16.mxu0 0
        %1135 = vmatpush1.bf16.msra.mxu0 0
        %1136 = vmatprep.subr.bf16.mxu0 0
        %1137 = vmatpush1.bf16.msra.mxu0 %v1057
        %1138 = vmatprep.subr.bf16.mxu0 0
        %1139 = vmatpush1.bf16.msra.mxu0 %v1054
        %1140 = vmatprep.subr.bf16.mxu0 0
        %1141 = vmatpush1.bf16.msra.mxu0 %v1051
        %1142 = vmatprep.subr.bf16.mxu0 0
        %1143 = vmatpush1.bf16.msra.mxu0 %v1048
        %1144 = vmatprep.subr.bf16.mxu0 0
        %1145 = vmatpush2.bf16.msra.mxu0 0
        %1146 = vmatprep.subr.bf16.mxu0 0
        %1147 = vmatpush2.bf16.msra.mxu0 0
        %1148 = vmatprep.subr.bf16.mxu0 0
        %1149 = vmatpush2.bf16.msra.mxu0 0
        %1150 = vmatprep.subr.bf16.mxu0 0
        %1151 = vmatpush2.bf16.msra.mxu0 0
        %1152 = vmatprep.subr.bf16.mxu0 0
        %1153 = vmatpush2.bf16.msra.mxu0 0
        %1154 = vmatprep.subr.bf16.mxu0 0
        %1155 = vmatpush2.bf16.msra.mxu0 0
        %1156 = vmatprep.subr.bf16.mxu0 0
        %1157 = vmatpush2.bf16.msra.mxu0 0
        %1158 = vmatprep.subr.bf16.mxu0 0
        %1159 = vmatpush2.bf16.msra.mxu0 0
        %1160 = vmatprep.mubr.bf16.mxu0 0
        %1161 = vmatmul.mubr.bf16.gmra.mxu0 %v1072
        %v1162 = vpop.f32.mrf.mxu0
        %v1163 = vadd.f32 0.0, %v1162
        %v1164 = vpop.f32.mrf.mxu0
        %v1165 = vpop.f32.mrf.mxu0
        %v1166 = vadd.f32 0.0, %v1165
        %v1167 = vpop.f32.mrf.mxu0
        %1168 = vmatprep.mubr.bf16.mxu0 0
        %1169 = vmatmul.mubr.bf16.gmra.mxu0 %v1075
        %v1170 = vpop.f32.mrf.mxu0
        %v1171 = vadd.f32 0.0, %v1170
        %v1172 = vpop.f32.mrf.mxu0
        %v1173 = vpop.f32.mrf.mxu0
        %v1174 = vpop.f32.mrf.mxu0
        %1175 = vdwg.mxu0
        %v1240 = vunpack.c.l.b16 %v798
        %v1241 = vunpack.c.h.b16 %v798
        %v1242 = vunpack.c.l.b16 %v799
        %v1243 = vunpack.c.l.b16 %v800
        %v1244 = vunpack.c.h.b16 %v800
        %v1245 = vunpack.c.l.b16 %v801
        %v1246 = vunpack.c.l.b16 %v802
        %v1247 = vunpack.c.h.b16 %v802
        %v1248 = vunpack.c.l.b16 %v803
        %v1249 = vunpack.c.l.b16 %v804
        %v1250 = vunpack.c.h.b16 %v804
        %v1251 = vunpack.c.l.b16 %v805
        %v1252 = vunpack.c.l.b16 %v806
        %v1253 = vunpack.c.h.b16 %v806
        %v1254 = vunpack.c.l.b16 %v807
        %v1255 = vunpack.c.l.b16 %v808
        %v1256 = vunpack.c.h.b16 %v808
        %v1257 = vunpack.c.l.b16 %v809
        %v1258 = vunpack.c.l.b16 %v810
        %v1259 = vunpack.c.h.b16 %v810
        %v1260 = vunpack.c.l.b16 %v811
        %v1261 = vunpack.c.l.b16 %v812
        %v1262 = vunpack.c.h.b16 %v812
        %v1263 = vunpack.c.l.b16 %v813
        %v1264 = vunpack.c.l.b16 %v814
        %v1265 = vunpack.c.h.b16 %v814
        %v1266 = vunpack.c.l.b16 %v815
        %v1267 = vunpack.c.l.b16 %v816
        %v1268 = vunpack.c.h.b16 %v816
        %v1269 = vunpack.c.l.b16 %v817
        %v1270 = vunpack.c.l.b16 %v818
        %v1271 = vunpack.c.h.b16 %v818
        %v1272 = vunpack.c.l.b16 %v819
        %v1273 = vunpack.c.l.b16 %v820
        %v1274 = vunpack.c.h.b16 %v820
        %v1275 = vunpack.c.l.b16 %v821
        %v1276 = vunpack.c.l.b16 %v822
        %v1277 = vunpack.c.h.b16 %v822
        %v1278 = vunpack.c.l.b16 %v823
        %v1279 = vunpack.c.l.b16 %v824
        %v1280 = vunpack.c.h.b16 %v824
        %v1281 = vunpack.c.l.b16 %v825
        %v1282 = vunpack.c.l.b16 %v826
        %v1283 = vunpack.c.h.b16 %v826
        %v1284 = vunpack.c.l.b16 %v827
        %v1285 = vunpack.c.l.b16 %v828
        %v1286 = vunpack.c.h.b16 %v828
        %v1287 = vunpack.c.l.b16 %v829
        %v1288 = vunpack.c.l.b16 %v830
        %v1289 = vunpack.c.h.b16 %v830
        %v1290 = vunpack.c.l.b16 %v831
        %v1291 = vunpack.c.l.b16 %v832
        %v1292 = vunpack.c.h.b16 %v832
        %v1293 = vunpack.c.l.b16 %v833
        %v1294 = vunpack.c.l.b16 %v834
        %v1295 = vunpack.c.h.b16 %v834
        %v1296 = vunpack.c.l.b16 %v835
        %v1297 = vunpack.c.l.b16 %v836
        %v1298 = vunpack.c.h.b16 %v836
        %v1299 = vunpack.c.l.b16 %v837
        %v1300 = vunpack.c.l.b16 %v838
        %v1301 = vunpack.c.h.b16 %v838
        %v1302 = vunpack.c.l.b16 %v839
        %v1303 = vunpack.c.l.b16 %v840
        %v1304 = vunpack.c.h.b16 %v840
        %v1305 = vunpack.c.l.b16 %v841
        %v1306 = vunpack.c.l.b16 %v842
        %v1307 = vunpack.c.h.b16 %v842
        %v1308 = vunpack.c.l.b16 %v843
        %v1309 = vunpack.c.l.b16 %v844
        %v1310 = vunpack.c.h.b16 %v844
        %v1311 = vunpack.c.l.b16 %v845
        %v1312 = vunpack.c.l.b16 %v846
        %v1313 = vunpack.c.h.b16 %v846
        %v1314 = vunpack.c.l.b16 %v847
        %v1315 = vunpack.c.l.b16 %v848
        %v1316 = vunpack.c.h.b16 %v848
        %v1317 = vunpack.c.l.b16 %v849
        %v1318 = vunpack.c.l.b16 %v850
        %v1319 = vunpack.c.h.b16 %v850
        %v1320 = vunpack.c.l.b16 %v851
        %v1321 = vunpack.c.l.b16 %v852
        %v1322 = vunpack.c.h.b16 %v852
        %v1323 = vunpack.c.l.b16 %v853
        %v1324 = vunpack.c.l.b16 %v854
        %v1325 = vunpack.c.h.b16 %v854
        %v1326 = vunpack.c.l.b16 %v855
        %v1327 = vunpack.c.l.b16 %v856
        %v1328 = vunpack.c.h.b16 %v856
        %v1329 = vunpack.c.l.b16 %v857
        %v1330 = vunpack.c.l.b16 %v858
        %v1331 = vunpack.c.h.b16 %v858
        %v1332 = vunpack.c.l.b16 %v859
        %v1333 = vunpack.c.l.b16 %v860
        %v1334 = vunpack.c.h.b16 %v860
        %v1335 = vunpack.c.l.b16 %v861
        %v1336 = vpack.c.b16 %v1243, %v1240
        %v1337 = vpack.c.b16 %v1244, %v1241
        %v1338 = vpack.c.b16 %v1245, %v1242
        %v1339 = vpack.c.b16 %v1249, %v1246
        %v1340 = vpack.c.b16 %v1250, %v1247
        %v1341 = vpack.c.b16 %v1251, %v1248
        %v1342 = vpack.c.b16 %v1255, %v1252
        %v1343 = vpack.c.b16 %v1256, %v1253
        %v1344 = vpack.c.b16 %v1257, %v1254
        %v1345 = vpack.c.b16 %v1261, %v1258
        %v1346 = vpack.c.b16 %v1262, %v1259
        %v1347 = vpack.c.b16 %v1263, %v1260
        %v1348 = vpack.c.b16 %v1267, %v1264
        %v1349 = vpack.c.b16 %v1268, %v1265
        %v1350 = vpack.c.b16 %v1269, %v1266
        %v1351 = vpack.c.b16 %v1273, %v1270
        %v1352 = vpack.c.b16 %v1274, %v1271
        %v1353 = vpack.c.b16 %v1275, %v1272
        %v1354 = vpack.c.b16 %v1279, %v1276
        %v1355 = vpack.c.b16 %v1280, %v1277
        %v1356 = vpack.c.b16 %v1281, %v1278
        %v1357 = vpack.c.b16 %v1285, %v1282
        %v1358 = vpack.c.b16 %v1286, %v1283
        %v1359 = vpack.c.b16 %v1287, %v1284
        %v1360 = vpack.c.b16 %v1291, %v1288
        %v1361 = vpack.c.b16 %v1292, %v1289
        %v1362 = vpack.c.b16 %v1293, %v1290
        %v1363 = vpack.c.b16 %v1297, %v1294
        %v1364 = vpack.c.b16 %v1298, %v1295
        %v1365 = vpack.c.b16 %v1299, %v1296
        %v1366 = vpack.c.b16 %v1303, %v1300
        %v1367 = vpack.c.b16 %v1304, %v1301
        %v1368 = vpack.c.b16 %v1305, %v1302
        %v1369 = vpack.c.b16 %v1309, %v1306
        %v1370 = vpack.c.b16 %v1310, %v1307
        %v1371 = vpack.c.b16 %v1311, %v1308
        %v1372 = vpack.c.b16 %v1315, %v1312
        %v1373 = vpack.c.b16 %v1316, %v1313
        %v1374 = vpack.c.b16 %v1317, %v1314
        %v1375 = vpack.c.b16 %v1321, %v1318
        %v1376 = vpack.c.b16 %v1322, %v1319
        %v1377 = vpack.c.b16 %v1323, %v1320
        %v1378 = vpack.c.b16 %v1327, %v1324
        %v1379 = vpack.c.b16 %v1328, %v1325
        %v1380 = vpack.c.b16 %v1329, %v1326
        %v1381 = vpack.c.b16 %v1333, %v1330
        %v1382 = vpack.c.b16 %v1334, %v1331
        %v1383 = vpack.c.b16 %v1335, %v1332
        %1432 = vmatprep.subr.bf16.mxu0 %v1358
        %1433 = vmatpush1.bf16.msra.mxu0 %v1357
        %1434 = vmatprep.subr.bf16.mxu0 %v1355
        %1435 = vmatpush1.bf16.msra.mxu0 %v1354
        %1436 = vmatprep.subr.bf16.mxu0 %v1352
        %1437 = vmatpush1.bf16.msra.mxu0 %v1351
        %1438 = vmatprep.subr.bf16.mxu0 %v1349
        %1439 = vmatpush1.bf16.msra.mxu0 %v1348
        %1440 = vmatprep.subr.bf16.mxu0 %v1346
        %1441 = vmatpush1.bf16.msra.mxu0 %v1345
        %1442 = vmatprep.subr.bf16.mxu0 %v1343
        %1443 = vmatpush1.bf16.msra.mxu0 %v1342
        %1444 = vmatprep.subr.bf16.mxu0 %v1340
        %1445 = vmatpush1.bf16.msra.mxu0 %v1339
        %1446 = vmatprep.subr.bf16.mxu0 %v1337
        %1447 = vmatpush1.bf16.msra.mxu0 %v1336
        %1448 = vmatprep.subr.bf16.mxu0 %v1382
        %1449 = vmatpush2.bf16.msra.mxu0 %v1381
        %1450 = vmatprep.subr.bf16.mxu0 %v1379
        %1451 = vmatpush2.bf16.msra.mxu0 %v1378
        %1452 = vmatprep.subr.bf16.mxu0 %v1376
        %1453 = vmatpush2.bf16.msra.mxu0 %v1375
        %1454 = vmatprep.subr.bf16.mxu0 %v1373
        %1455 = vmatpush2.bf16.msra.mxu0 %v1372
        %1456 = vmatprep.subr.bf16.mxu0 %v1370
        %1457 = vmatpush2.bf16.msra.mxu0 %v1369
        %1458 = vmatprep.subr.bf16.mxu0 %v1367
        %1459 = vmatpush2.bf16.msra.mxu0 %v1366
        %1460 = vmatprep.subr.bf16.mxu0 %v1364
        %1461 = vmatpush2.bf16.msra.mxu0 %v1363
        %1462 = vmatprep.subr.bf16.mxu0 %v1361
        %1463 = vmatpush2.bf16.msra.mxu0 %v1360
        %1464 = vmatprep.mubr.bf16.mxu0 %v795
        %1465 = vmatmul.mubr.bf16.gmra.mxu0 %v794
        %v1466 = vpop.f32.mrf.mxu0
        %v1467 = vadd.f32 %v1112, %v1466
        %v1468 = vpop.f32.mrf.mxu0
        %v1469 = vadd.f32 %v1114, %v1468
        %v1470 = vpop.f32.mrf.mxu0
        %v1471 = vadd.f32 %v1116, %v1470
        %v1472 = vpop.f32.mrf.mxu0
        %v1473 = vadd.f32 %v1118, %v1472
        %1474 = vmatprep.mubr.bf16.mxu0 %v797
        %1475 = vmatmul.mubr.bf16.gmra.mxu0 %v796
        %v1476 = vpop.f32.mrf.mxu0
        %v1477 = vadd.f32 %v1122, %v1476
        %v1478 = vpop.f32.mrf.mxu0
        %v1479 = vadd.f32 %v1124, %v1478
        %v1480 = vpop.f32.mrf.mxu0
        %v1481 = vpop.f32.mrf.mxu0
        %1482 = vdwg.mxu0
        %1483 = vmatprep.subr.bf16.mxu0 0
        %1484 = vmatpush1.bf16.msra.mxu0 %v1359
        %1485 = vmatprep.subr.bf16.mxu0 0
        %1486 = vmatpush1.bf16.msra.mxu0 %v1356
        %1487 = vmatprep.subr.bf16.mxu0 0
        %1488 = vmatpush1.bf16.msra.mxu0 %v1353
        %1489 = vmatprep.subr.bf16.mxu0 0
        %1490 = vmatpush1.bf16.msra.mxu0 %v1350
        %1491 = vmatprep.subr.bf16.mxu0 0
        %1492 = vmatpush1.bf16.msra.mxu0 %v1347
        %1493 = vmatprep.subr.bf16.mxu0 0
        %1494 = vmatpush1.bf16.msra.mxu0 %v1344
        %1495 = vmatprep.subr.bf16.mxu0 0
        %1496 = vmatpush1.bf16.msra.mxu0 %v1341
        %1497 = vmatprep.subr.bf16.mxu0 0
        %1498 = vmatpush1.bf16.msra.mxu0 %v1338
        %1499 = vmatprep.subr.bf16.mxu0 0
        %1500 = vmatpush2.bf16.msra.mxu0 %v1383
        %1501 = vmatprep.subr.bf16.mxu0 0
        %1502 = vmatpush2.bf16.msra.mxu0 %v1380
        %1503 = vmatprep.subr.bf16.mxu0 0
        %1504 = vmatpush2.bf16.msra.mxu0 %v1377
        %1505 = vmatprep.subr.bf16.mxu0 0
        %1506 = vmatpush2.bf16.msra.mxu0 %v1374
        %1507 = vmatprep.subr.bf16.mxu0 0
        %1508 = vmatpush2.bf16.msra.mxu0 %v1371
        %1509 = vmatprep.subr.bf16.mxu0 0
        %1510 = vmatpush2.bf16.msra.mxu0 %v1368
        %1511 = vmatprep.subr.bf16.mxu0 0
        %1512 = vmatpush2.bf16.msra.mxu0 %v1365
        %1513 = vmatprep.subr.bf16.mxu0 0
        %1514 = vmatpush2.bf16.msra.mxu0 %v1362
        %1515 = vmatprep.mubr.bf16.mxu0 %v795
        %1516 = vmatmul.mubr.bf16.gmra.mxu0 %v794
        %v1517 = vpop.f32.mrf.mxu0
        %v1518 = vadd.f32 %v1163, %v1517
        %v1519 = vpop.f32.mrf.mxu0
        %v1520 = vpop.f32.mrf.mxu0
        %v1521 = vadd.f32 %v1166, %v1520
        %v1522 = vpop.f32.mrf.mxu0
        %1523 = vmatprep.mubr.bf16.mxu0 %v797
        %1524 = vmatmul.mubr.bf16.gmra.mxu0 %v796
        %v1525 = vpop.f32.mrf.mxu0
        %v1526 = vadd.f32 %v1171, %v1525
        %v1527 = vpop.f32.mrf.mxu0
        %v1528 = vpop.f32.mrf.mxu0
        %v1529 = vpop.f32.mrf.mxu0
        %1530 = vdwg.mxu0
        %v1532 = vlaneseq
        %v1533 = vshrl.u32 %v1532, 7
        %v1534 = vsub.s32 0, %v1533
        %v1535 = vrot.slane %v369, %v1534
        %v1536 = vlaneseq
        %v1537 = vshrl.u32 %v1536, 7
        %v1538 = vsub.s32 1, %v1537
        %v1539 = vrot.slane %v369, %v1538
        %v1540 = vlaneseq
        %v1541 = vshrl.u32 %v1540, 7
        %v1542 = vsub.s32 2, %v1541
        %v1543 = vrot.slane %v369, %v1542
        %v1547 = vadd.f32 %v1467, %v1535
        %v1548 = vadd.f32 %v1469, %v1539
        %v1549 = vadd.f32 %v1518, %v1543
        %v1550 = vadd.f32 %v1471, %v1535
        %v1551 = vadd.f32 %v1473, %v1539
        %v1552 = vadd.f32 %v1521, %v1543
        %v1553 = vadd.f32 %v1477, %v1535
        %v1554 = vadd.f32 %v1479, %v1539
        %v1555 = vadd.f32 %v1526, %v1543
        %v1556 = vadd.f32 %v1547, %v1548
        %v1557 = vadd.f32 %v1556, %v1549
        %1558 = vadd.xlane.f32.xlu0 %v1557
        %v1559 = vpop.xlane.xlu0 %1558
        %v1560 = vadd.f32 %v1550, %v1551
        %v1561 = vadd.f32 %v1560, %v1552
        %1562 = vadd.xlane.f32.xlu0 %v1561
        %v1563 = vpop.xlane.xlu0 %1562
        %v1564 = vadd.f32 %v1553, %v1554
        %v1565 = vadd.f32 %v1564, %v1555
        %1566 = vadd.xlane.f32.xlu0 %v1565
        %v1567 = vpop.xlane.xlu0 %1566
        %v1568 = vrcp.pop 384.0
        %v1569 = vmul.f32 %v1559, %v1568
        %v1570 = vmul.f32 %v1563, %v1568
        %v1571 = vmul.f32 %v1567, %v1568
        %v1572 = vsub.f32 %v1547, %v1569
        %v1573 = vsub.f32 %v1548, %v1569
        %v1574 = vsub.f32 %v1549, %v1569
        %v1575 = vsub.f32 %v1550, %v1570
        %v1576 = vsub.f32 %v1551, %v1570
        %v1577 = vsub.f32 %v1552, %v1570
        %v1578 = vsub.f32 %v1553, %v1571
        %v1579 = vsub.f32 %v1554, %v1571
        %v1580 = vsub.f32 %v1555, %v1571
        %v1581 = vmul.f32 %v1572, %v1572
        %v1582 = vmul.f32 %v1573, %v1573
        %v1583 = vmul.f32 %v1574, %v1574
        %v1584 = vmul.f32 %v1575, %v1575
        %v1585 = vmul.f32 %v1576, %v1576
        %v1586 = vmul.f32 %v1577, %v1577
        %v1587 = vmul.f32 %v1578, %v1578
        %v1588 = vmul.f32 %v1579, %v1579
        %v1589 = vmul.f32 %v1580, %v1580
        %v1590 = vadd.f32 %v1581, %v1582
        %v1591 = vadd.f32 %v1590, %v1583
        %1592 = vadd.xlane.f32.xlu0 %v1591
        %v1593 = vpop.xlane.xlu0 %1592
        %v1594 = vadd.f32 %v1584, %v1585
        %v1595 = vadd.f32 %v1594, %v1586
        %1596 = vadd.xlane.f32.xlu0 %v1595
        %v1597 = vpop.xlane.xlu0 %1596
        %v1598 = vadd.f32 %v1587, %v1588
        %v1599 = vadd.f32 %v1598, %v1589
        %1600 = vadd.xlane.f32.xlu0 %v1599
        %v1601 = vpop.xlane.xlu0 %1600
        %v1602 = vmul.f32 %v1593, %v1568
        %v1603 = vmul.f32 %v1597, %v1568
        %v1604 = vmul.f32 %v1601, %v1568
        %v1605 = vadd.f32 %v1602, 1e-05
        %v1606 = vadd.f32 %v1603, 1e-05
        %v1607 = vadd.f32 %v1604, 1e-05
        %v1608 = vrsqrt.pop %v1605
        %v1609 = vrsqrt.pop %v1606
        %v1610 = vrsqrt.pop %v1607
        %v1611 = vmul.f32 %v1572, %v1608
        %v1612 = vmul.f32 %v1573, %v1608
        %v1613 = vmul.f32 %v1574, %v1608
        %v1614 = vmul.f32 %v1575, %v1609
        %v1615 = vmul.f32 %v1576, %v1609
        %v1616 = vmul.f32 %v1577, %v1609
        %v1617 = vmul.f32 %v1578, %v1610
        %v1618 = vmul.f32 %v1579, %v1610
        %v1619 = vmul.f32 %v1580, %v1610
        %v1621 = vlaneseq
        %v1622 = vshrl.u32 %v1621, 7
        %v1623 = vsub.s32 0, %v1622
        %v1624 = vrot.slane %v370, %v1623
        %v1625 = vlaneseq
        %v1626 = vshrl.u32 %v1625, 7
        %v1627 = vsub.s32 1, %v1626
        %v1628 = vrot.slane %v370, %v1627
        %v1629 = vlaneseq
        %v1630 = vshrl.u32 %v1629, 7
        %v1631 = vsub.s32 2, %v1630
        %v1632 = vrot.slane %v370, %v1631
        %v1636 = vmul.f32 %v1611, %v1624
        %v1637 = vmul.f32 %v1612, %v1628
        %v1638 = vmul.f32 %v1613, %v1632
        %v1639 = vmul.f32 %v1614, %v1624
        %v1640 = vmul.f32 %v1615, %v1628
        %v1641 = vmul.f32 %v1616, %v1632
        %v1642 = vmul.f32 %v1617, %v1624
        %v1643 = vmul.f32 %v1618, %v1628
        %v1644 = vmul.f32 %v1619, %v1632
        %v1646 = vlaneseq
        %v1647 = vshrl.u32 %v1646, 7
        %v1648 = vsub.s32 0, %v1647
        %v1649 = vrot.slane %v371, %v1648
        %v1650 = vlaneseq
        %v1651 = vshrl.u32 %v1650, 7
        %v1652 = vsub.s32 1, %v1651
        %v1653 = vrot.slane %v371, %v1652
        %v1654 = vlaneseq
        %v1655 = vshrl.u32 %v1654, 7
        %v1656 = vsub.s32 2, %v1655
        %v1657 = vrot.slane %v371, %v1656
        %v1661 = vadd.f32 %v1636, %v1649
        %v1662 = vadd.f32 %v1637, %v1653
        %v1663 = vadd.f32 %v1638, %v1657
        %v1664 = vadd.f32 %v1639, %v1649
        %v1665 = vadd.f32 %v1640, %v1653
        %v1666 = vadd.f32 %v1641, %v1657
        %v1667 = vadd.f32 %v1642, %v1649
        %v1668 = vadd.f32 %v1643, %v1653
        %v1669 = vadd.f32 %v1644, %v1657
        %1670 = vst [vmem:[%s357] sm:$0xff] %v1661
        %1671 = vst [vmem:[%s357 + $0x8] sm:$0xff] %v1662
        %1672 = vst [vmem:[%s357 + $0x10] sm:$0xff] %v1663
        %1673 = vst [vmem:[%s357 + $0x18] sm:$0xff] %v1664
        %1674 = vst [vmem:[%s357 + $0x20] sm:$0xff] %v1665
        %1675 = vst [vmem:[%s357 + $0x28] sm:$0xff] %v1666
        %1676 = vst [vmem:[%s357 + $0x30] sm:$0xff] %v1667
        %1677 = vst [vmem:[%s357 + $0x38] sm:$0xff] %v1668
        %1678 = vst [vmem:[%s357 + $0x40] sm:$0xff] %v1669
        %s1679 = sand.u32 %s191, 1
        %s1680 = scalar_lea.sflag [#allocation4], %s1679
        %s1681 = sand.u32 %s191, 1
        %s1682 = smul.addr %s1681, 72
        %s1683 = scalar_lea.vmem [#allocation10], %s1682
        // Predicated region
        $region65: #{_video_embedding_forward.1} parent=47 // pred_check
          %p1684 = pneg %p201
        $region66: #{_video_embedding_forward.1} parent=47 // pred_check_branch
          %1686 = sbr.rel (%p1684) target = $region68
        $region67: #{_video_embedding_forward.1} parent=47 // pred_region
          %s1687 = smul.u32 3, %s26
          %s1689 = ssub.s32 1152, 1152
          %1690 = vsyncadd %s1680, %s1689
          %s1691 = smul.addr %s1687, 3
          %s1692 = smul.addr %s1691, 128
          %s1693 = scalar_lea.hbm %s7, %s1692
          %s1694 = sshll.u32 %s1683, 4
          %s1695 = int_to_ptr.vmem [resolvable:$true] %s1694
          %1700 = dma.vmem_to_hbm [thread:$0]  %s1695, 1152, %s1693, %s1680, 384, 384, 24
        $region68: #{_video_embedding_forward.1} parent=47 // pred_fallthru
          _
      $region48: #{_video_embedding_forward.1} parent=5 // pred_fallthru
        _
      %p1701 = scmp.le.s32.totalorder 2, %s21
      // Predicated region
      $region69: #{_video_embedding_forward.1} parent=5 // pred_check
        %p1702 = pneg %p1701
      $region70: #{_video_embedding_forward.1} parent=5 // pred_check_branch
        %1704 = sbr.rel (%p1702) target = $region72
      $region71: #{_video_embedding_forward.1} parent=5 // pred_region
        %s1705 = ssub.s32 %s21, 2
        // Predicated region
        $region73: #{_video_embedding_forward.1} parent=71 // pred_check
          %p1706 = pneg %p207
        $region74: #{_video_embedding_forward.1} parent=71 // pred_check_branch
          %1708 = sbr.rel (%p1706) target = $region76
        $region75: #{_video_embedding_forward.1} parent=71 // pred_region
          %s1709 = sand.u32 %s192, 1
          %s1710 = scalar_lea.sflag [#allocation4], %s1709
          %s1711 = sand.u32 %s192, 1
          %s1712 = smul.addr %s1711, 72
          %s1713 = scalar_lea.vmem [#allocation10], %s1712
          %1714 = dma.done %s1710, 1152
        $region76: #{_video_embedding_forward.1} parent=71 // pred_fallthru
          _
      $region72: #{_video_embedding_forward.1} parent=5 // pred_fallthru
        _
    $region6: #{_video_embedding_forward.1} parent=1 // loop_footer
      %s25 = sadd.s32 1, %s21
    $region7: #{_video_embedding_forward.1} parent=1 // loop_footer_branch
      %20 = sbr.rel target = $region3
    $region8: #{_video_embedding_forward.1} parent=1 // loop_exit
      _
    %1715 = vsyncpa [#allocation3], 1
    %s1716 = scalar_lea.sflag [#allocation3], 1
    %1717 = vsyncpa %s1716, 1
    %1718 = vsyncpa [#allocation6], 1
    %1719 = vsyncpa [#allocation9], 1
    %1720 = vsyncpa [#allocation4], 1
    %s1721 = scalar_lea.sflag [#allocation4], 1
    %1722 = vsyncpa %s1721, 1

</llo_original>
